<compile_context>
chip_gen: v7x
topology: tpu7x:2x2x1
jax: 0.10.0
libtpu: 0.0.40
codegen_flags: <defaults>
</compile_context>

<pallas_src>
import math
import functools

import jax
import jax.numpy as jnp
from jax.experimental import pallas as pl
from jax.experimental.pallas import tpu as pltpu


def _memory_mha_kernel(q_ref, k_ref, v_ref, kmem_ref, vmem_ref,
                       wq_ref, bq_ref, wk_ref, bk_ref, wv_ref, bv_ref,
                       wo_ref, bo_ref, gamma_ref, beta_ref, lnmask_ref,
                       o_ref, att_ref, *, h, d_k, d_v, ln_dim, eps, mxu_dtype):
    """One grid step = one batch tile.
       q_ref: (bb, nq, dmp); k_ref/v_ref: (bb, nk, dmp)   [dmp = d_model padded to 128*k]
       kmem_ref: (h, nm, d_k), vmem_ref: (h, nm, d_v)      [fc_k/fc_v-projected memory, head-major]
       wq_ref/bq_ref already carry the 1/sqrt(d_k) scale.  att_ref: (bb*nq, h*d_v) VMEM scratch.
    """
    bb, nq, dmp = q_ref.shape
    nk = k_ref.shape[1]
    nm = kmem_ref.shape[1]

    if mxu_dtype is None:
        mx = lambda x: x
    else:
        mx = lambda x: x.astype(mxu_dtype)      # bf16 MXU inputs on v6e/v7x (f32 accumulate)

    # ---- fused whole-tile projections: one wide MXU matmul each, f32 accumulation ----
    q2 = q_ref[...].reshape(bb * nq, dmp)
    k2 = k_ref[...].reshape(bb * nk, dmp)
    v2 = v_ref[...].reshape(bb * nk, dmp)
    q_proj = jnp.dot(mx(q2), mx(wq_ref[...]), preferred_element_type=jnp.float32) + bq_ref[...]
    k_proj = jnp.dot(mx(k2), mx(wk_ref[...]), preferred_element_type=jnp.float32) + bk_ref[...]
    v_proj = jnp.dot(mx(v2), mx(wv_ref[...]), preferred_element_type=jnp.float32) + bv_ref[...]

    # ---- head-major fold: (bb*seq, h*d) -> (bb*h, seq, d) via slice + leading-axis stack ----
    # One batched contraction below replaces h tiny per-head matmuls; an N-D transpose of a
    # second-minor axis is deliberately avoided (limited Mosaic transpose support).
    def to_heads(x, seq, d):
        parts = [x[:, i * d:(i + 1) * d].reshape(bb, seq, d) for i in range(h)]
        return jnp.stack(parts, axis=1).reshape(bb * h, seq, d)

    q_bh = to_heads(q_proj, nq, d_k)                      # (bb*h, nq, d_k), pre-scaled
    k_bh = to_heads(k_proj, nk, d_k)                      # (bb*h, nk, d_k)
    v_bh = to_heads(v_proj, nk, d_v)                      # (bb*h, nk, d_v)
    kmem = jnp.broadcast_to(kmem_ref[...][None], (bb, h, nm, d_k)).reshape(bb * h, nm, d_k)
    vmem = jnp.broadcast_to(vmem_ref[...][None], (bb, h, nm, d_v)).reshape(bb * h, nm, d_v)

    # ---- joint softmax over [sequence keys ; memory slots], all heads in ONE batched matmul ----
    # TODO(synk): the two key groups could be fused into one lane-padded key axis (exp(-inf)=0);
    # kept as a shared-max/denominator split to avoid an unaligned sublane concat — same math.
    s_seq = jnp.einsum('bqd,bkd->bqk', q_bh, k_bh, preferred_element_type=jnp.float32)
    s_mem = jnp.einsum('bqd,bmd->bqm', q_bh, kmem, preferred_element_type=jnp.float32)
    m = jnp.maximum(jnp.max(s_seq, axis=-1, keepdims=True),
                    jnp.max(s_mem, axis=-1, keepdims=True))
    p_seq = jnp.exp(s_seq - m)
    p_mem = jnp.exp(s_mem - m)
    denom = jnp.sum(p_seq, axis=-1, keepdims=True) + jnp.sum(p_mem, axis=-1, keepdims=True)
    r = pl.reciprocal(denom, approx=True)                 # EUP slot (nearly free)
    inv = r * (2.0 - denom * r)                           # one Newton step -> ~f32 accuracy
    # TODO(synk): attention dropout is identity here (inference / eval mode).
    o_bh = (jnp.einsum('bqk,bkd->bqd', p_seq, v_bh, preferred_element_type=jnp.float32)
            + jnp.einsum('bqm,bmd->bqd', p_mem, vmem, preferred_element_type=jnp.float32)) * inv

    # ---- re-pack heads into the fc_o input layout via the pre-allocated VMEM scratch ----
    o4 = o_bh.reshape(bb, h, nq, d_v)
    for i in range(h):
        att_ref[:, i * d_v:(i + 1) * d_v] = o4[:, i].reshape(bb * nq, d_v)

    # ---- epilogue: single fc_o matmul (K = h*d_v), residual, LayerNorm ----
    out = jnp.dot(mx(att_ref[...]), mx(wo_ref[...]),
                  preferred_element_type=jnp.float32) + bo_ref[...]
    # TODO(synk): output dropout is identity here (inference / eval mode).
    res = q_ref[...].reshape(bb * nq, dmp).astype(jnp.float32) + out   # re-read: no live f32 copy
    lane_mask = lnmask_ref[...]                                        # 1 on real lanes, 0 on pads
    mean = jnp.sum(res, axis=-1, keepdims=True) * (1.0 / ln_dim)
    diff = (res - mean) * lane_mask
    var = jnp.sum(diff * diff, axis=-1, keepdims=True) * (1.0 / ln_dim)
    y = diff * jax.lax.rsqrt(var + eps) * gamma_ref[...] + beta_ref[...]
    o_ref[...] = y.reshape(bb, nq, dmp).astype(o_ref.dtype)            # lane-dense (dmp % 128 == 0)


def _pick_block_b(b_s, nq, nk, dmp, h, d_k, d_v, nm, budget_bytes=8 * 1024 * 1024):
    """Largest divisor of b_s whose per-step f32 working set fits the budget, keeping >= 2 steps
    so the 'parallel' batch axis shards across v7x TensorCores and the block DMAs pipeline."""
    nk_all = nk + nm
    per_b = 4 * (
        4 * nq * dmp                                  # query block (double-buffered) + epilogue
        + 4 * 2 * nk * dmp                            # key / value blocks (double-buffered)
        + nq * h * d_k + nk * h * (d_k + d_v)         # fused projections
        + 2 * (nq + nk) * h * max(d_k, d_v)           # head-major copies
        + 3 * h * nq * nk_all                         # scores + probabilities
        + 3 * nq * h * d_v                            # attend output + att scratch
        + 3 * nq * dmp                                # fc_o output + residual + normalized result
    )
    best = 1
    for cand in range(2, b_s + 1):
        if b_s % cand == 0 and b_s // cand >= 2 and cand * per_b <= budget_bytes:
            best = cand
    return best


def memory_mha_forward(params, queries, keys, values, *, h, d_k, d_v,
                       block_b=None, mxu_dtype=None, interpret=False):
    b_s, nq, d_model = queries.shape
    nk = keys.shape[1]
    nm = params["k_memory"].shape[1]
    f32 = jnp.float32

    # --- host-side, batch-independent prep (tiny; fused by XLA) ---
    scale = 1.0 / math.sqrt(d_k)
    wq_s = params["wq"] * scale                 # fold 1/sqrt(d_k) into the Q projection
    bq_s = params["bq"] * scale

    # Memory-slot rows through k_w / v_w, then fc_k / fc_v once (linearity), stored HEAD-MAJOR.
    k_mem = params["k_memory"][0] @ params["w_kw"] + params["b_kw"]          # (nm, d_model)
    v_mem = params["v_memory"][0] @ params["w_vw"] + params["b_vw"]
    k_mem_h = (k_mem @ params["wk"] + params["bk"]).reshape(nm, h, d_k).transpose(1, 0, 2)
    v_mem_h = (v_mem @ params["wv"] + params["bv"]).reshape(nm, h, d_v).transpose(1, 0, 2)

    # Lane-dense feature axis: zero-pad d_model to a multiple of 128 (no-op when already aligned).
    dmp = ((d_model + 127) // 128) * 128
    pad = dmp - d_model
    pad3 = lambda x: jnp.pad(x, ((0, 0), (0, 0), (0, pad)))
    q_p, k_p, v_p = pad3(queries), pad3(keys), pad3(values)
    wq_p = jnp.pad(wq_s, ((0, pad), (0, 0)))
    wk_p = jnp.pad(params["wk"], ((0, pad), (0, 0)))
    wv_p = jnp.pad(params["wv"], ((0, pad), (0, 0)))
    wo_p = jnp.pad(params["wo"], ((0, 0), (0, pad)))
    bo_p = jnp.pad(params["bo"], (0, pad))
    gamma_p = jnp.pad(params["gamma"], (0, pad))
    beta_p = jnp.pad(params["beta"], (0, pad))
    lane_mask = (jnp.arange(dmp) < d_model).astype(f32)[None, :]

    # --- batch tiling ---
    if block_b is None:
        block_b = _pick_block_b(b_s, nq, nk, dmp, h, d_k, d_v, nm)
    assert b_s % block_b == 0, "block_b must divide the batch size"
    grid = (b_s // block_b,)

    kernel = functools.partial(_memory_mha_kernel, h=h, d_k=d_k, d_v=d_v,
                               ln_dim=d_model, eps=1e-5, mxu_dtype=mxu_dtype)

    def const_spec(shape):
        n = len(shape)
        # TODO(synk): pipeline_mode=pl.Buffered(1) would single-buffer these constant blocks
        # (saves VMEM on v7x); left at the default to stay on the most portable code path.
        return pl.BlockSpec(shape, lambda i, _n=n: (0,) * _n)

    in_specs = [
        pl.BlockSpec((block_b, nq, dmp), lambda i: (i, 0, 0)),   # queries (padded, lane-dense)
        pl.BlockSpec((block_b, nk, dmp), lambda i: (i, 0, 0)),   # keys   (no memory concat in HBM)
        pl.BlockSpec((block_b, nk, dmp), lambda i: (i, 0, 0)),   # values
        const_spec((h, nm, d_k)),            # projected memory keys   (head-major)
        const_spec((h, nm, d_v)),            # projected memory values (head-major)
        const_spec((dmp, h * d_k)),          # wq (pre-scaled, row-padded)
        const_spec((1, h * d_k)),            # bq (pre-scaled)
        const_spec((dmp, h * d_k)),          # wk
        const_spec((1, h * d_k)),            # bk
        const_spec((dmp, h * d_v)),          # wv
        const_spec((1, h * d_v)),            # bv
        const_spec((h * d_v, dmp)),          # wo (col-padded)
        const_spec((1, dmp)),                # bo
        const_spec((1, dmp)),                # gamma
        const_spec((1, dmp)),                # beta
        const_spec((1, dmp)),                # LayerNorm lane mask
    ]
    out_spec = pl.BlockSpec((block_b, nq, dmp), lambda i: (i, 0, 0))

    out = pl.pallas_call(
        kernel,
        out_shape=jax.ShapeDtypeStruct((b_s, nq, dmp), queries.dtype),
        grid=grid,
        in_specs=in_specs,
        out_specs=out_spec,
        scratch_shapes=[pltpu.VMEM((block_b * nq, h * d_v), jnp.float32)],   # att accumulator
        compiler_params=pltpu.CompilerParams(
            dimension_semantics=("parallel",),        # batch tiles shard across v7x TensorCores
            vmem_limit_bytes=32 * 1024 * 1024),
        interpret=interpret,
    )(q_p, k_p, v_p, k_mem_h, v_mem_h,
      wq_p, bq_s[None, :], wk_p, params["bk"][None, :], wv_p, params["bv"][None, :],
      wo_p, bo_p[None, :], gamma_p[None, :], beta_p[None, :], lane_mask)

    return out[..., :d_model]


def memory_mha_reference(params, queries, keys, values, *, h, d_k, d_v):
    """Pure-JAX reference mirroring the PyTorch forward (eval mode: dropout = identity)."""
    b_s, nq, d_model = queries.shape
    k_mem = params["k_memory"][0] @ params["w_kw"] + params["b_kw"]
    v_mem = params["v_memory"][0] @ params["w_vw"] + params["b_vw"]
    keys = jnp.concatenate([keys, jnp.broadcast_to(k_mem[None], (b_s,) + k_mem.shape)], 1)
    values = jnp.concatenate([values, jnp.broadcast_to(v_mem[None], (b_s,) + v_mem.shape)], 1)
    nk = keys.shape[1]
    q = (queries @ params["wq"] + params["bq"]).reshape(b_s, nq, h, d_k).transpose(0, 2, 1, 3)
    k = (keys @ params["wk"] + params["bk"]).reshape(b_s, nk, h, d_k).transpose(0, 2, 3, 1)
    v = (values @ params["wv"] + params["bv"]).reshape(b_s, nk, h, d_v).transpose(0, 2, 1, 3)
    att = jax.nn.softmax(jnp.matmul(q, k) / math.sqrt(d_k), axis=-1)
    out = jnp.matmul(att, v).transpose(0, 2, 1, 3).reshape(b_s, nq, h * d_v)
    out = out @ params["wo"] + params["bo"]
    res = queries + out
    mean = res.mean(-1, keepdims=True)
    var = ((res - mean) ** 2).mean(-1, keepdims=True)
    return (res - mean) / jnp.sqrt(var + 1e-5) * params["gamma"] + params["beta"]


def init_params(key, d_model, d_k, d_v, h, num_memory):
    ks = jax.random.split(key, 8)

    def xavier(k, fan_in, fan_out):
        bound = math.sqrt(6.0 / (fan_in + fan_out))
        return jax.random.uniform(k, (fan_in, fan_out), jnp.float32, -bound, bound)

    return dict(
        wq=xavier(ks[0], d_model, h * d_k), bq=jnp.zeros((h * d_k,), jnp.float32),
        wk=xavier(ks[1], d_model, h * d_k), bk=jnp.zeros((h * d_k,), jnp.float32),
        wv=xavier(ks[2], d_model, h * d_v), bv=jnp.zeros((h * d_v,), jnp.float32),
        wo=xavier(ks[3], h * d_v, d_model), bo=jnp.zeros((d_model,), jnp.float32),
        k_memory=jax.random.normal(ks[4], (1, num_memory, d_model), jnp.float32) / math.sqrt(d_k),
        v_memory=jax.random.normal(ks[5], (1, num_memory, d_model), jnp.float32) / math.sqrt(num_memory),
        w_kw=xavier(ks[6], d_model, d_model), b_kw=jnp.zeros((d_model,), jnp.float32),
        w_vw=xavier(ks[7], d_model, d_model), b_vw=jnp.zeros((d_model,), jnp.float32),
        gamma=jnp.ones((d_model,), jnp.float32), beta=jnp.zeros((d_model,), jnp.float32),
    )


if __name__ == "__main__":
    b_s, nq, nk = 2, 8, 8
    d_model, d_k, d_v, h, num_memory = 32, 8, 8, 4, 10

    root = jax.random.PRNGKey(0)
    kp, kq, kk, kv = jax.random.split(root, 4)
    params = init_params(kp, d_model, d_k, d_v, h, num_memory)

    queries = jax.random.normal(kq, (b_s, nq, d_model), jnp.float32)
    keys = jax.random.normal(kk, (b_s, nk, d_model), jnp.float32)
    values = jax.random.normal(kv, (b_s, nk, d_model), jnp.float32)

    # mxu_dtype=jnp.bfloat16 is the v6e/v7x fast path; kept at f32 here to hold the 1e-4 check.
    out = memory_mha_forward(params, queries, keys, values, h=h, d_k=d_k, d_v=d_v)
    out = jax.block_until_ready(out)

    ref = memory_mha_reference(params, queries, keys, values, h=h, d_k=d_k, d_v=d_v)
    assert out.shape == (b_s, nq, d_model)
    assert jnp.allclose(out, ref, atol=1e-4, rtol=1e-4), float(jnp.max(jnp.abs(out - ref)))

    print("KERNEL_OK")
</pallas_src>

<mosaic_0001>
module attributes {stable_mosaic.version = 11 : i64} {
  func.func @_memory_mha_kernel(%arg0: i32, %arg1: memref<1x8x128xf32, #tpu.memory_space<vmem>>, %arg2: memref<1x8x128xf32, #tpu.memory_space<vmem>>, %arg3: memref<1x8x128xf32, #tpu.memory_space<vmem>>, %arg4: memref<4x10x8xf32, #tpu.memory_space<vmem>>, %arg5: memref<4x10x8xf32, #tpu.memory_space<vmem>>, %arg6: memref<128x32xf32, #tpu.memory_space<vmem>>, %arg7: memref<1x32xf32, #tpu.memory_space<vmem>>, %arg8: memref<128x32xf32, #tpu.memory_space<vmem>>, %arg9: memref<1x32xf32, #tpu.memory_space<vmem>>, %arg10: memref<128x32xf32, #tpu.memory_space<vmem>>, %arg11: memref<1x32xf32, #tpu.memory_space<vmem>>, %arg12: memref<32x128xf32, #tpu.memory_space<vmem>>, %arg13: memref<1x128xf32, #tpu.memory_space<vmem>>, %arg14: memref<1x128xf32, #tpu.memory_space<vmem>>, %arg15: memref<1x128xf32, #tpu.memory_space<vmem>>, %arg16: memref<1x128xf32, #tpu.memory_space<vmem>>, %arg17: memref<1x8x128xf32, #tpu.memory_space<vmem>>, %arg18: memref<8x32xf32, #tpu.memory_space<vmem>>) attributes {dimension_semantics = [#tpu.dimension_semantics<parallel>], iteration_bounds = array<i64: 2>, scalar_prefetch = 0 : i64, scratch_operands = 1 : i64, tpu.core_type = #tpu.core_type<tc>, window_params = [{transform_indices = @transform_0, window_bounds = array<i64: 1, 8, 128>}, {transform_indices = @transform_1, window_bounds = array<i64: 1, 8, 128>}, {transform_indices = @transform_2, window_bounds = array<i64: 1, 8, 128>}, {pipeline_mode = #tpu.pipeline_mode<synchronous>, transform_indices = @transform_3, window_bounds = array<i64: 4, 10, 8>}, {pipeline_mode = #tpu.pipeline_mode<synchronous>, transform_indices = @transform_4, window_bounds = array<i64: 4, 10, 8>}, {pipeline_mode = #tpu.pipeline_mode<synchronous>, transform_indices = @transform_5, window_bounds = array<i64: 128, 32>}, {pipeline_mode = #tpu.pipeline_mode<synchronous>, transform_indices = @transform_6, window_bounds = array<i64: 1, 32>}, {pipeline_mode = #tpu.pipeline_mode<synchronous>, transform_indices = @transform_7, window_bounds = array<i64: 128, 32>}, {pipeline_mode = #tpu.pipeline_mode<synchronous>, transform_indices = @transform_8, window_bounds = array<i64: 1, 32>}, {pipeline_mode = #tpu.pipeline_mode<synchronous>, transform_indices = @transform_9, window_bounds = array<i64: 128, 32>}, {pipeline_mode = #tpu.pipeline_mode<synchronous>, transform_indices = @transform_10, window_bounds = array<i64: 1, 32>}, {pipeline_mode = #tpu.pipeline_mode<synchronous>, transform_indices = @transform_11, window_bounds = array<i64: 32, 128>}, {pipeline_mode = #tpu.pipeline_mode<synchronous>, transform_indices = @transform_12, window_bounds = array<i64: 1, 128>}, {pipeline_mode = #tpu.pipeline_mode<synchronous>, transform_indices = @transform_13, window_bounds = array<i64: 1, 128>}, {pipeline_mode = #tpu.pipeline_mode<synchronous>, transform_indices = @transform_14, window_bounds = array<i64: 1, 128>}, {pipeline_mode = #tpu.pipeline_mode<synchronous>, transform_indices = @transform_15, window_bounds = array<i64: 1, 128>}, {transform_indices = @transform_16, window_bounds = array<i64: 1, 8, 128>}]} {
    %c0 = arith.constant 0 : index
    %c0_0 = arith.constant 0 : index
    %c0_1 = arith.constant 0 : index
    %0 = vector.load %arg1[%c0, %c0_0, %c0_1] : memref<1x8x128xf32, #tpu.memory_space<vmem>>, vector<1x8x128xf32>
    %1 = vector.shape_cast %0 : vector<1x8x128xf32> to vector<8x128xf32>
    %c0_2 = arith.constant 0 : index
    %c0_3 = arith.constant 0 : index
    %c0_4 = arith.constant 0 : index
    %2 = vector.load %arg2[%c0_2, %c0_3, %c0_4] : memref<1x8x128xf32, #tpu.memory_space<vmem>>, vector<1x8x128xf32>
    %3 = vector.shape_cast %2 : vector<1x8x128xf32> to vector<8x128xf32>
    %c0_5 = arith.constant 0 : index
    %c0_6 = arith.constant 0 : index
    %c0_7 = arith.constant 0 : index
    %4 = vector.load %arg3[%c0_5, %c0_6, %c0_7] : memref<1x8x128xf32, #tpu.memory_space<vmem>>, vector<1x8x128xf32>
    %5 = vector.shape_cast %4 : vector<1x8x128xf32> to vector<8x128xf32>
    %c0_8 = arith.constant 0 : index
    %c0_9 = arith.constant 0 : index
    %6 = vector.load %arg6[%c0_8, %c0_9] : memref<128x32xf32, #tpu.memory_space<vmem>>, vector<128x32xf32>
    %cst = arith.constant dense<0.000000e+00> : vector<8x32xf32>
    %7 = tpu.matmul %1, %6, %cst {dimension_numbers = #tpu.dot_dimension_numbers<[1], [0], [0], [1], [0, 0, 1, 1], [], []>} : vector<8x128xf32>, vector<128x32xf32>, vector<8x32xf32> -> vector<8x32xf32>
    %c0_10 = arith.constant 0 : index
    %c0_11 = arith.constant 0 : index
    %8 = vector.load %arg7[%c0_10, %c0_11] : memref<1x32xf32, #tpu.memory_space<vmem>>, vector<1x32xf32>
    %9 = vector.broadcast %8 : vector<1x32xf32> to vector<8x32xf32>
    %10 = arith.addf %7, %9 : vector<8x32xf32>
    %c0_12 = arith.constant 0 : index
    %c0_13 = arith.constant 0 : index
    %11 = vector.load %arg8[%c0_12, %c0_13] : memref<128x32xf32, #tpu.memory_space<vmem>>, vector<128x32xf32>
    %cst_14 = arith.constant dense<0.000000e+00> : vector<8x32xf32>
    %12 = tpu.matmul %3, %11, %cst_14 {dimension_numbers = #tpu.dot_dimension_numbers<[1], [0], [0], [1], [0, 0, 1, 1], [], []>} : vector<8x128xf32>, vector<128x32xf32>, vector<8x32xf32> -> vector<8x32xf32>
    %c0_15 = arith.constant 0 : index
    %c0_16 = arith.constant 0 : index
    %13 = vector.load %arg9[%c0_15, %c0_16] : memref<1x32xf32, #tpu.memory_space<vmem>>, vector<1x32xf32>
    %14 = vector.broadcast %13 : vector<1x32xf32> to vector<8x32xf32>
    %15 = arith.addf %12, %14 : vector<8x32xf32>
    %c0_17 = arith.constant 0 : index
    %c0_18 = arith.constant 0 : index
    %16 = vector.load %arg10[%c0_17, %c0_18] : memref<128x32xf32, #tpu.memory_space<vmem>>, vector<128x32xf32>
    %cst_19 = arith.constant dense<0.000000e+00> : vector<8x32xf32>
    %17 = tpu.matmul %5, %16, %cst_19 {dimension_numbers = #tpu.dot_dimension_numbers<[1], [0], [0], [1], [0, 0, 1, 1], [], []>} : vector<8x128xf32>, vector<128x32xf32>, vector<8x32xf32> -> vector<8x32xf32>
    %c0_20 = arith.constant 0 : index
    %c0_21 = arith.constant 0 : index
    %18 = vector.load %arg11[%c0_20, %c0_21] : memref<1x32xf32, #tpu.memory_space<vmem>>, vector<1x32xf32>
    %19 = vector.broadcast %18 : vector<1x32xf32> to vector<8x32xf32>
    %20 = arith.addf %17, %19 : vector<8x32xf32>
    %21 = vector.extract_strided_slice %10 {offsets = [0, 0], sizes = [8, 8], strides = [1, 1]} : vector<8x32xf32> to vector<8x8xf32>
    %22 = vector.shape_cast %21 : vector<8x8xf32> to vector<1x8x8xf32>
    %23 = vector.extract_strided_slice %10 {offsets = [0, 8], sizes = [8, 8], strides = [1, 1]} : vector<8x32xf32> to vector<8x8xf32>
    %24 = vector.shape_cast %23 : vector<8x8xf32> to vector<1x8x8xf32>
    %25 = vector.extract_strided_slice %10 {offsets = [0, 16], sizes = [8, 8], strides = [1, 1]} : vector<8x32xf32> to vector<8x8xf32>
    %26 = vector.shape_cast %25 : vector<8x8xf32> to vector<1x8x8xf32>
    %27 = vector.extract_strided_slice %10 {offsets = [0, 24], sizes = [8, 8], strides = [1, 1]} : vector<8x32xf32> to vector<8x8xf32>
    %28 = vector.shape_cast %27 : vector<8x8xf32> to vector<1x8x8xf32>
    %29 = vector.shape_cast %22 : vector<1x8x8xf32> to vector<1x1x8x8xf32>
    %30 = vector.shape_cast %24 : vector<1x8x8xf32> to vector<1x1x8x8xf32>
    %31 = vector.shape_cast %26 : vector<1x8x8xf32> to vector<1x1x8x8xf32>
    %32 = vector.shape_cast %28 : vector<1x8x8xf32> to vector<1x1x8x8xf32>
    %33 = tpu.concatenate %29, %30, %31, %32 in 1 : vector<1x1x8x8xf32>, vector<1x1x8x8xf32>, vector<1x1x8x8xf32>, vector<1x1x8x8xf32> -> vector<1x4x8x8xf32>
    %34 = vector.shape_cast %33 : vector<1x4x8x8xf32> to vector<4x8x8xf32>
    %35 = vector.extract_strided_slice %15 {offsets = [0, 0], sizes = [8, 8], strides = [1, 1]} : vector<8x32xf32> to vector<8x8xf32>
    %36 = vector.shape_cast %35 : vector<8x8xf32> to vector<1x8x8xf32>
    %37 = vector.extract_strided_slice %15 {offsets = [0, 8], sizes = [8, 8], strides = [1, 1]} : vector<8x32xf32> to vector<8x8xf32>
    %38 = vector.shape_cast %37 : vector<8x8xf32> to vector<1x8x8xf32>
    %39 = vector.extract_strided_slice %15 {offsets = [0, 16], sizes = [8, 8], strides = [1, 1]} : vector<8x32xf32> to vector<8x8xf32>
    %40 = vector.shape_cast %39 : vector<8x8xf32> to vector<1x8x8xf32>
    %41 = vector.extract_strided_slice %15 {offsets = [0, 24], sizes = [8, 8], strides = [1, 1]} : vector<8x32xf32> to vector<8x8xf32>
    %42 = vector.shape_cast %41 : vector<8x8xf32> to vector<1x8x8xf32>
    %43 = vector.shape_cast %36 : vector<1x8x8xf32> to vector<1x1x8x8xf32>
    %44 = vector.shape_cast %38 : vector<1x8x8xf32> to vector<1x1x8x8xf32>
    %45 = vector.shape_cast %40 : vector<1x8x8xf32> to vector<1x1x8x8xf32>
    %46 = vector.shape_cast %42 : vector<1x8x8xf32> to vector<1x1x8x8xf32>
    %47 = tpu.concatenate %43, %44, %45, %46 in 1 : vector<1x1x8x8xf32>, vector<1x1x8x8xf32>, vector<1x1x8x8xf32>, vector<1x1x8x8xf32> -> vector<1x4x8x8xf32>
    %48 = vector.shape_cast %47 : vector<1x4x8x8xf32> to vector<4x8x8xf32>
    %49 = vector.extract_strided_slice %20 {offsets = [0, 0], sizes = [8, 8], strides = [1, 1]} : vector<8x32xf32> to vector<8x8xf32>
    %50 = vector.shape_cast %49 : vector<8x8xf32> to vector<1x8x8xf32>
    %51 = vector.extract_strided_slice %20 {offsets = [0, 8], sizes = [8, 8], strides = [1, 1]} : vector<8x32xf32> to vector<8x8xf32>
    %52 = vector.shape_cast %51 : vector<8x8xf32> to vector<1x8x8xf32>
    %53 = vector.extract_strided_slice %20 {offsets = [0, 16], sizes = [8, 8], strides = [1, 1]} : vector<8x32xf32> to vector<8x8xf32>
    %54 = vector.shape_cast %53 : vector<8x8xf32> to vector<1x8x8xf32>
    %55 = vector.extract_strided_slice %20 {offsets = [0, 24], sizes = [8, 8], strides = [1, 1]} : vector<8x32xf32> to vector<8x8xf32>
    %56 = vector.shape_cast %55 : vector<8x8xf32> to vector<1x8x8xf32>
    %57 = vector.shape_cast %50 : vector<1x8x8xf32> to vector<1x1x8x8xf32>
    %58 = vector.shape_cast %52 : vector<1x8x8xf32> to vector<1x1x8x8xf32>
    %59 = vector.shape_cast %54 : vector<1x8x8xf32> to vector<1x1x8x8xf32>
    %60 = vector.shape_cast %56 : vector<1x8x8xf32> to vector<1x1x8x8xf32>
    %61 = tpu.concatenate %57, %58, %59, %60 in 1 : vector<1x1x8x8xf32>, vector<1x1x8x8xf32>, vector<1x1x8x8xf32>, vector<1x1x8x8xf32> -> vector<1x4x8x8xf32>
    %62 = vector.shape_cast %61 : vector<1x4x8x8xf32> to vector<4x8x8xf32>
    %c0_22 = arith.constant 0 : index
    %c0_23 = arith.constant 0 : index
    %c0_24 = arith.constant 0 : index
    %63 = vector.load %arg4[%c0_22, %c0_23, %c0_24] : memref<4x10x8xf32, #tpu.memory_space<vmem>>, vector<4x10x8xf32>
    %64 = vector.shape_cast %63 : vector<4x10x8xf32> to vector<1x4x10x8xf32>
    %65 = vector.shape_cast %64 : vector<1x4x10x8xf32> to vector<4x10x8xf32>
    %c0_25 = arith.constant 0 : index
    %c0_26 = arith.constant 0 : index
    %c0_27 = arith.constant 0 : index
    %66 = vector.load %arg5[%c0_25, %c0_26, %c0_27] : memref<4x10x8xf32, #tpu.memory_space<vmem>>, vector<4x10x8xf32>
    %67 = vector.shape_cast %66 : vector<4x10x8xf32> to vector<1x4x10x8xf32>
    %68 = vector.shape_cast %67 : vector<1x4x10x8xf32> to vector<4x10x8xf32>
    "tpu.trace_start"() <{level = 10 : i32, message = "bqd,bkd->bqk"}> : () -> ()
    %cst_28 = arith.constant dense<0.000000e+00> : vector<4x8x8xf32>
    %69 = tpu.matmul %34, %48, %cst_28 {dimension_numbers = #tpu.dot_dimension_numbers<[2], [2], [1], [1], [0, 0, 0, 1, 1, 1], [0], [0]>} : vector<4x8x8xf32>, vector<4x8x8xf32>, vector<4x8x8xf32> -> vector<4x8x8xf32>
    "tpu.trace_stop"() : () -> ()
    "tpu.trace_start"() <{level = 10 : i32, message = "bqd,bmd->bqm"}> : () -> ()
    %cst_29 = arith.constant dense<0.000000e+00> : vector<4x8x10xf32>
    %70 = tpu.matmul %34, %65, %cst_29 {dimension_numbers = #tpu.dot_dimension_numbers<[2], [2], [1], [1], [0, 0, 0, 1, 1, 1], [0], [0]>} : vector<4x8x8xf32>, vector<4x10x8xf32>, vector<4x8x10xf32> -> vector<4x8x10xf32>
    "tpu.trace_stop"() : () -> ()
    %cst_30 = arith.constant dense<0xFF800000> : vector<4x8xf32>
    %71 = vector.multi_reduction <maximumf>, %69, %cst_30 [2] : vector<4x8x8xf32> to vector<4x8xf32>
    %72 = vector.shape_cast %71 : vector<4x8xf32> to vector<4x8x1xf32>
    %cst_31 = arith.constant dense<0xFF800000> : vector<4x8xf32>
    %73 = vector.multi_reduction <maximumf>, %70, %cst_31 [2] : vector<4x8x10xf32> to vector<4x8xf32>
    %74 = vector.shape_cast %73 : vector<4x8xf32> to vector<4x8x1xf32>
    %75 = arith.maximumf %72, %74 : vector<4x8x1xf32>
    %76 = vector.broadcast %75 : vector<4x8x1xf32> to vector<4x8x8xf32>
    %77 = arith.subf %69, %76 : vector<4x8x8xf32>
    %78 = math.exp %77 : vector<4x8x8xf32>
    %79 = vector.broadcast %75 : vector<4x8x1xf32> to vector<4x8x10xf32>
    %80 = arith.subf %70, %79 : vector<4x8x10xf32>
    %81 = math.exp %80 : vector<4x8x10xf32>
    %cst_32 = arith.constant dense<0.000000e+00> : vector<4x8xf32>
    %82 = vector.multi_reduction <add>, %78, %cst_32 [2] : vector<4x8x8xf32> to vector<4x8xf32>
    %83 = vector.shape_cast %82 : vector<4x8xf32> to vector<4x8x1xf32>
    %cst_33 = arith.constant dense<0.000000e+00> : vector<4x8xf32>
    %84 = vector.multi_reduction <add>, %81, %cst_33 [2] : vector<4x8x10xf32> to vector<4x8xf32>
    %85 = vector.shape_cast %84 : vector<4x8xf32> to vector<4x8x1xf32>
    %86 = arith.addf %83, %85 : vector<4x8x1xf32>
    %87 = tpu.reciprocal %86 {approx = true} : vector<4x8x1xf32> -> vector<4x8x1xf32>
    %88 = arith.mulf %86, %87 : vector<4x8x1xf32>
    %cst_34 = arith.constant 2.000000e+00 : f32
    %89 = vector.broadcast %cst_34 : f32 to vector<4x8x1xf32>
    %90 = arith.subf %89, %88 : vector<4x8x1xf32>
    %91 = arith.mulf %87, %90 : vector<4x8x1xf32>
    "tpu.trace_start"() <{level = 10 : i32, message = "bqk,bkd->bqd"}> : () -> ()
    %cst_35 = arith.constant dense<0.000000e+00> : vector<4x8x8xf32>
    %92 = tpu.matmul %78, %62, %cst_35 {dimension_numbers = #tpu.dot_dimension_numbers<[2], [1], [1], [2], [0, 0, 0, 1, 1, 2], [0], [0]>} : vector<4x8x8xf32>, vector<4x8x8xf32>, vector<4x8x8xf32> -> vector<4x8x8xf32>
    "tpu.trace_stop"() : () -> ()
    "tpu.trace_start"() <{level = 10 : i32, message = "bqm,bmd->bqd"}> : () -> ()
    %cst_36 = arith.constant dense<0.000000e+00> : vector<4x8x8xf32>
    %93 = tpu.matmul %81, %68, %cst_36 {dimension_numbers = #tpu.dot_dimension_numbers<[2], [1], [1], [2], [0, 0, 0, 1, 1, 2], [0], [0]>} : vector<4x8x10xf32>, vector<4x10x8xf32>, vector<4x8x8xf32> -> vector<4x8x8xf32>
    "tpu.trace_stop"() : () -> ()
    %94 = arith.addf %92, %93 : vector<4x8x8xf32>
    %95 = vector.broadcast %91 : vector<4x8x1xf32> to vector<4x8x8xf32>
    %96 = arith.mulf %94, %95 : vector<4x8x8xf32>
    %97 = vector.shape_cast %96 : vector<4x8x8xf32> to vector<1x4x8x8xf32>
    %98 = vector.extract_strided_slice %97 {offsets = [0, 0, 0, 0], sizes = [1, 1, 8, 8], strides = [1, 1, 1, 1]} : vector<1x4x8x8xf32> to vector<1x1x8x8xf32>
    %99 = vector.shape_cast %98 : vector<1x1x8x8xf32> to vector<1x8x8xf32>
    %100 = vector.shape_cast %99 : vector<1x8x8xf32> to vector<8x8xf32>
    %c0_37 = arith.constant 0 : index
    %c0_38 = arith.constant 0 : index
    %101 = vector.load %arg18[%c0_37, %c0_38] : memref<8x32xf32, #tpu.memory_space<vmem>>, vector<8x8xf32>
    tpu.vector_store %arg18[%c0_37, %c0_38], %100 {strides = array<i32>} : memref<8x32xf32, #tpu.memory_space<vmem>>, vector<8x8xf32>,
    %102 = vector.extract_strided_slice %97 {offsets = [0, 1, 0, 0], sizes = [1, 1, 8, 8], strides = [1, 1, 1, 1]} : vector<1x4x8x8xf32> to vector<1x1x8x8xf32>
    %103 = vector.shape_cast %102 : vector<1x1x8x8xf32> to vector<1x8x8xf32>
    %104 = vector.shape_cast %103 : vector<1x8x8xf32> to vector<8x8xf32>
    %c0_39 = arith.constant 0 : index
    %c8 = arith.constant 8 : index
    %105 = vector.load %arg18[%c0_39, %c8] : memref<8x32xf32, #tpu.memory_space<vmem>>, vector<8x8xf32>
    tpu.vector_store %arg18[%c0_39, %c8], %104 {strides = array<i32>} : memref<8x32xf32, #tpu.memory_space<vmem>>, vector<8x8xf32>,
    %106 = vector.extract_strided_slice %97 {offsets = [0, 2, 0, 0], sizes = [1, 1, 8, 8], strides = [1, 1, 1, 1]} : vector<1x4x8x8xf32> to vector<1x1x8x8xf32>
    %107 = vector.shape_cast %106 : vector<1x1x8x8xf32> to vector<1x8x8xf32>
    %108 = vector.shape_cast %107 : vector<1x8x8xf32> to vector<8x8xf32>
    %c0_40 = arith.constant 0 : index
    %c16 = arith.constant 16 : index
    %109 = vector.load %arg18[%c0_40, %c16] : memref<8x32xf32, #tpu.memory_space<vmem>>, vector<8x8xf32>
    tpu.vector_store %arg18[%c0_40, %c16], %108 {strides = array<i32>} : memref<8x32xf32, #tpu.memory_space<vmem>>, vector<8x8xf32>,
    %110 = vector.extract_strided_slice %97 {offsets = [0, 3, 0, 0], sizes = [1, 1, 8, 8], strides = [1, 1, 1, 1]} : vector<1x4x8x8xf32> to vector<1x1x8x8xf32>
    %111 = vector.shape_cast %110 : vector<1x1x8x8xf32> to vector<1x8x8xf32>
    %112 = vector.shape_cast %111 : vector<1x8x8xf32> to vector<8x8xf32>
    %c0_41 = arith.constant 0 : index
    %c24 = arith.constant 24 : index
    %113 = vector.load %arg18[%c0_41, %c24] : memref<8x32xf32, #tpu.memory_space<vmem>>, vector<8x8xf32>
    tpu.vector_store %arg18[%c0_41, %c24], %112 {strides = array<i32>} : memref<8x32xf32, #tpu.memory_space<vmem>>, vector<8x8xf32>,
    %c0_42 = arith.constant 0 : index
    %c0_43 = arith.constant 0 : index
    %114 = vector.load %arg18[%c0_42, %c0_43] : memref<8x32xf32, #tpu.memory_space<vmem>>, vector<8x32xf32>
    %c0_44 = arith.constant 0 : index
    %c0_45 = arith.constant 0 : index
    %115 = vector.load %arg12[%c0_44, %c0_45] : memref<32x128xf32, #tpu.memory_space<vmem>>, vector<32x128xf32>
    %cst_46 = arith.constant dense<0.000000e+00> : vector<8x128xf32>
    %116 = tpu.matmul %114, %115, %cst_46 {dimension_numbers = #tpu.dot_dimension_numbers<[1], [0], [0], [1], [0, 0, 1, 1], [], []>} : vector<8x32xf32>, vector<32x128xf32>, vector<8x128xf32> -> vector<8x128xf32>
    %c0_47 = arith.constant 0 : index
    %c0_48 = arith.constant 0 : index
    %117 = vector.load %arg13[%c0_47, %c0_48] : memref<1x128xf32, #tpu.memory_space<vmem>>, vector<1x128xf32>
    %118 = vector.broadcast %117 : vector<1x128xf32> to vector<8x128xf32>
    %119 = arith.addf %116, %118 : vector<8x128xf32>
    %c0_49 = arith.constant 0 : index
    %c0_50 = arith.constant 0 : index
    %c0_51 = arith.constant 0 : index
    %120 = vector.load %arg1[%c0_49, %c0_50, %c0_51] : memref<1x8x128xf32, #tpu.memory_space<vmem>>, vector<1x8x128xf32>
    %121 = vector.shape_cast %120 : vector<1x8x128xf32> to vector<8x128xf32>
    %122 = arith.addf %121, %119 : vector<8x128xf32>
    %c0_52 = arith.constant 0 : index
    %c0_53 = arith.constant 0 : index
    %123 = vector.load %arg16[%c0_52, %c0_53] : memref<1x128xf32, #tpu.memory_space<vmem>>, vector<1x128xf32>
    %cst_54 = arith.constant dense<0.000000e+00> : vector<8xf32>
    %124 = vector.multi_reduction <add>, %122, %cst_54 [1] : vector<8x128xf32> to vector<8xf32>
    %125 = vector.shape_cast %124 : vector<8xf32> to vector<8x1xf32>
    %cst_55 = arith.constant 3.125000e-02 : f32
    %126 = vector.broadcast %cst_55 : f32 to vector<8x1xf32>
    %127 = arith.mulf %125, %126 : vector<8x1xf32>
    %128 = vector.broadcast %127 : vector<8x1xf32> to vector<8x128xf32>
    %129 = arith.subf %122, %128 : vector<8x128xf32>
    %130 = vector.broadcast %123 : vector<1x128xf32> to vector<8x128xf32>
    %131 = arith.mulf %129, %130 : vector<8x128xf32>
    %132 = arith.mulf %131, %131 : vector<8x128xf32>
    %cst_56 = arith.constant dense<0.000000e+00> : vector<8xf32>
    %133 = vector.multi_reduction <add>, %132, %cst_56 [1] : vector<8x128xf32> to vector<8xf32>
    %134 = vector.shape_cast %133 : vector<8xf32> to vector<8x1xf32>
    %cst_57 = arith.constant 3.125000e-02 : f32
    %135 = vector.broadcast %cst_57 : f32 to vector<8x1xf32>
    %136 = arith.mulf %134, %135 : vector<8x1xf32>
    %cst_58 = arith.constant 9.99999974E-6 : f32
    %137 = vector.broadcast %cst_58 : f32 to vector<8x1xf32>
    %138 = arith.addf %136, %137 : vector<8x1xf32>
    %139 = math.rsqrt %138 : vector<8x1xf32>
    %140 = vector.broadcast %139 : vector<8x1xf32> to vector<8x128xf32>
    %141 = arith.mulf %131, %140 : vector<8x128xf32>
    %c0_59 = arith.constant 0 : index
    %c0_60 = arith.constant 0 : index
    %142 = vector.load %arg14[%c0_59, %c0_60] : memref<1x128xf32, #tpu.memory_space<vmem>>, vector<1x128xf32>
    %143 = vector.broadcast %142 : vector<1x128xf32> to vector<8x128xf32>
    %144 = arith.mulf %141, %143 : vector<8x128xf32>
    %c0_61 = arith.constant 0 : index
    %c0_62 = arith.constant 0 : index
    %145 = vector.load %arg15[%c0_61, %c0_62] : memref<1x128xf32, #tpu.memory_space<vmem>>, vector<1x128xf32>
    %146 = vector.broadcast %145 : vector<1x128xf32> to vector<8x128xf32>
    %147 = arith.addf %144, %146 : vector<8x128xf32>
    %148 = vector.shape_cast %147 : vector<8x128xf32> to vector<1x8x128xf32>
    %c0_63 = arith.constant 0 : index
    %c0_64 = arith.constant 0 : index
    %c0_65 = arith.constant 0 : index
    %149 = vector.load %arg17[%c0_63, %c0_64, %c0_65] : memref<1x8x128xf32, #tpu.memory_space<vmem>>, vector<1x8x128xf32>
    tpu.vector_store %arg17[%c0_63, %c0_64, %c0_65], %148 {strides = array<i32>} : memref<1x8x128xf32, #tpu.memory_space<vmem>>, vector<1x8x128xf32>,
    return
  }
  func.func @transform_0(%arg0: i32) -> (i32, i32, i32) {
    %c0_i32 = arith.constant 0 : i32
    %c0_i32_0 = arith.constant 0 : i32
    %c0_i32_1 = arith.constant 0 : i32
    return %arg0, %c0_i32, %c0_i32_0 : i32, i32, i32
  }
  func.func @transform_1(%arg0: i32) -> (i32, i32, i32) {
    %c0_i32 = arith.constant 0 : i32
    %c0_i32_0 = arith.constant 0 : i32
    %c0_i32_1 = arith.constant 0 : i32
    return %arg0, %c0_i32, %c0_i32_0 : i32, i32, i32
  }
  func.func @transform_2(%arg0: i32) -> (i32, i32, i32) {
    %c0_i32 = arith.constant 0 : i32
    %c0_i32_0 = arith.constant 0 : i32
    %c0_i32_1 = arith.constant 0 : i32
    return %arg0, %c0_i32, %c0_i32_0 : i32, i32, i32
  }
  func.func @transform_3(%arg0: i32) -> (i32, i32, i32) {
    %c0_i32 = arith.constant 0 : i32
    %c0_i32_0 = arith.constant 0 : i32
    %c0_i32_1 = arith.constant 0 : i32
    %c0_i32_2 = arith.constant 0 : i32
    return %c0_i32, %c0_i32_0, %c0_i32_1 : i32, i32, i32
  }
  func.func @transform_4(%arg0: i32) -> (i32, i32, i32) {
    %c0_i32 = arith.constant 0 : i32
    %c0_i32_0 = arith.constant 0 : i32
    %c0_i32_1 = arith.constant 0 : i32
    %c0_i32_2 = arith.constant 0 : i32
    return %c0_i32, %c0_i32_0, %c0_i32_1 : i32, i32, i32
  }
  func.func @transform_5(%arg0: i32) -> (i32, i32) {
    %c0_i32 = arith.constant 0 : i32
    %c0_i32_0 = arith.constant 0 : i32
    %c0_i32_1 = arith.constant 0 : i32
    return %c0_i32, %c0_i32_0 : i32, i32
  }
  func.func @transform_6(%arg0: i32) -> (i32, i32) {
    %c0_i32 = arith.constant 0 : i32
    %c0_i32_0 = arith.constant 0 : i32
    %c0_i32_1 = arith.constant 0 : i32
    return %c0_i32, %c0_i32_0 : i32, i32
  }
  func.func @transform_7(%arg0: i32) -> (i32, i32) {
    %c0_i32 = arith.constant 0 : i32
    %c0_i32_0 = arith.constant 0 : i32
    %c0_i32_1 = arith.constant 0 : i32
    return %c0_i32, %c0_i32_0 : i32, i32
  }
  func.func @transform_8(%arg0: i32) -> (i32, i32) {
    %c0_i32 = arith.constant 0 : i32
    %c0_i32_0 = arith.constant 0 : i32
    %c0_i32_1 = arith.constant 0 : i32
    return %c0_i32, %c0_i32_0 : i32, i32
  }
  func.func @transform_9(%arg0: i32) -> (i32, i32) {
    %c0_i32 = arith.constant 0 : i32
    %c0_i32_0 = arith.constant 0 : i32
    %c0_i32_1 = arith.constant 0 : i32
    return %c0_i32, %c0_i32_0 : i32, i32
  }
  func.func @transform_10(%arg0: i32) -> (i32, i32) {
    %c0_i32 = arith.constant 0 : i32
    %c0_i32_0 = arith.constant 0 : i32
    %c0_i32_1 = arith.constant 0 : i32
    return %c0_i32, %c0_i32_0 : i32, i32
  }
  func.func @transform_11(%arg0: i32) -> (i32, i32) {
    %c0_i32 = arith.constant 0 : i32
    %c0_i32_0 = arith.constant 0 : i32
    %c0_i32_1 = arith.constant 0 : i32
    return %c0_i32, %c0_i32_0 : i32, i32
  }
  func.func @transform_12(%arg0: i32) -> (i32, i32) {
    %c0_i32 = arith.constant 0 : i32
    %c0_i32_0 = arith.constant 0 : i32
    %c0_i32_1 = arith.constant 0 : i32
    return %c0_i32, %c0_i32_0 : i32, i32
  }
  func.func @transform_13(%arg0: i32) -> (i32, i32) {
    %c0_i32 = arith.constant 0 : i32
    %c0_i32_0 = arith.constant 0 : i32
    %c0_i32_1 = arith.constant 0 : i32
    return %c0_i32, %c0_i32_0 : i32, i32
  }
  func.func @transform_14(%arg0: i32) -> (i32, i32) {
    %c0_i32 = arith.constant 0 : i32
    %c0_i32_0 = arith.constant 0 : i32
    %c0_i32_1 = arith.constant 0 : i32
    return %c0_i32, %c0_i32_0 : i32, i32
  }
  func.func @transform_15(%arg0: i32) -> (i32, i32) {
    %c0_i32 = arith.constant 0 : i32
    %c0_i32_0 = arith.constant 0 : i32
    %c0_i32_1 = arith.constant 0 : i32
    return %c0_i32, %c0_i32_0 : i32, i32
  }
  func.func @transform_16(%arg0: i32) -> (i32, i32, i32) {
    %c0_i32 = arith.constant 0 : i32
    %c0_i32_0 = arith.constant 0 : i32
    %c0_i32_1 = arith.constant 0 : i32
    return %arg0, %c0_i32, %c0_i32_0 : i32, i32, i32
  }
}

</mosaic_0001>

<llo_original>
// kernel: tpu_custom_call.1
$region0: #{tpu_custom_call.1}
  #allocation0 [shape = 'u32[]', space=smem, size = 0x4, offset = 0x4, fixed_abs, tag = 'smem constant byte address 0x4 - core index']
  #allocation1 [shape = 'u32[144,128]{1,0:T(1,128)}', space=vmem, size = 0x12000, scoped, tag = 'internal scratch']
  #allocation2 [shape = 'f32[8,32]{1,0:T(8,128)}', space=vmem, size = 0x1000, scoped, tag = 'scratch operand']
  %s0 = inlined_call_operand.vmem [shape: f32[2,8,128], index: 0, kind: input, shape index: {}]
  %s1 = inlined_call_operand.vmem [shape: f32[2,8,128], index: 1, kind: input, shape index: {}]
  %s2 = inlined_call_operand.vmem [shape: f32[2,8,128], index: 2, kind: input, shape index: {}]
  %s3 = inlined_call_operand.vmem [shape: f32[4,10,8], index: 3, kind: input, shape index: {}]
  %s4 = inlined_call_operand.vmem [shape: f32[4,10,8], index: 4, kind: input, shape index: {}]
  %s5 = inlined_call_operand.vmem [shape: f32[128,32], index: 5, kind: input, shape index: {}]
  %s6 = inlined_call_operand.vmem [shape: f32[1,32], index: 6, kind: input, shape index: {}]
  %s7 = inlined_call_operand.vmem [shape: f32[128,32], index: 7, kind: input, shape index: {}]
  %s8 = inlined_call_operand.vmem [shape: f32[1,32], index: 8, kind: input, shape index: {}]
  %s9 = inlined_call_operand.vmem [shape: f32[128,32], index: 9, kind: input, shape index: {}]
  %s10 = inlined_call_operand.vmem [shape: f32[1,32], index: 10, kind: input, shape index: {}]
  %s11 = inlined_call_operand.vmem [shape: f32[32,128], index: 11, kind: input, shape index: {}]
  %s12 = inlined_call_operand.vmem [shape: f32[1,128], index: 12, kind: input, shape index: {}]
  %s13 = inlined_call_operand.vmem [shape: f32[1,128], index: 13, kind: input, shape index: {}]
  %s14 = inlined_call_operand.vmem [shape: f32[1,128], index: 14, kind: input, shape index: {}]
  %s15 = inlined_call_operand.vmem [shape: f32[1,128], index: 15, kind: input, shape index: {}]
  %s16 = inlined_call_operand.hbm [shape: f32[2,8,128], index: 16, kind: output, shape index: {}]
  %s17 = sld [smem:[#allocation0]]
  $region97: #{tpu_custom_call.1} parent=0
    _
  %s19 = ssub.s32 1, %s17
  %s20 = scalar_select 0, %s19, %s17
  $region1: #{tpu_custom_call.1} parent=0
    #allocation3 [shape = 'u8[8192]{0}', space=vmem, size = 0x2000, scoped, tag = 'output window, operand 0']
    #allocation4 [shape = 's32[2]{0}', space=sflag, size = 0x8, scoped, tag = 'scoped memory for tpu_custom_call.1']
    %21 = vsyncpa [#allocation4], 0
    %s22 = scalar_lea.sflag [#allocation4], 1
    %23 = vsyncpa %s22, 0
    loop: start=0, step=1, limit=4
    $region2: #{tpu_custom_call.1} parent=1 // loop_pre_header
      _
    $region3: #{tpu_custom_call.1} parent=1 // loop_header
      %s25 = sphi 0, %s29
      %p26 = scmp.ge.s32.totalorder %s25, 4
      %s35 = sphi 0, %s37
      %s38 = sphi 0, %s35
      %s39 = sphi 0, %s38
      %s55 = sphi 0, %s39
      %s61 = sphi 0, %s63
      %s64 = sphi 0, %s61
      %s65 = sphi 0, %s64
      %s81 = sphi 0, %s65
      %s87 = sphi 0, %s89
      %s90 = sphi 0, %s87
      %s91 = sphi 0, %s90
      %s107 = sphi 0, %s91
      %s111 = sphi 0, %s111
      %s113 = sphi 0, %s111
      %s114 = sphi 0, %s113
      %s128 = sphi 0, %s114
      %s132 = sphi 0, %s132
      %s134 = sphi 0, %s132
      %s135 = sphi 0, %s134
      %s149 = sphi 0, %s135
      %s153 = sphi 0, %s153
      %s155 = sphi 0, %s153
      %s156 = sphi 0, %s155
      %s170 = sphi 0, %s156
      %s174 = sphi 0, %s174
      %s176 = sphi 0, %s174
      %s177 = sphi 0, %s176
      %s191 = sphi 0, %s177
      %s195 = sphi 0, %s195
      %s197 = sphi 0, %s195
      %s198 = sphi 0, %s197
      %s212 = sphi 0, %s198
      %s216 = sphi 0, %s216
      %s218 = sphi 0, %s216
      %s219 = sphi 0, %s218
      %s233 = sphi 0, %s219
      %s237 = sphi 0, %s237
      %s239 = sphi 0, %s237
      %s240 = sphi 0, %s239
      %s254 = sphi 0, %s240
      %s258 = sphi 0, %s258
      %s260 = sphi 0, %s258
      %s261 = sphi 0, %s260
      %s275 = sphi 0, %s261
      %s279 = sphi 0, %s279
      %s281 = sphi 0, %s279
      %s282 = sphi 0, %s281
      %s296 = sphi 0, %s282
      %s300 = sphi 0, %s300
      %s302 = sphi 0, %s300
      %s303 = sphi 0, %s302
      %s317 = sphi 0, %s303
      %s321 = sphi 0, %s321
      %s323 = sphi 0, %s321
      %s324 = sphi 0, %s323
      %s338 = sphi 0, %s324
      %s342 = sphi 0, %s342
      %s344 = sphi 0, %s342
      %s345 = sphi 0, %s344
      %s359 = sphi 0, %s345
      %s363 = sphi 0, %s363
      %s365 = sphi 0, %s363
      %s366 = sphi 0, %s365
      %s380 = sphi 0, %s366
      %s386 = sphi 0, %s388
      %s389 = sphi 0, %s386
      %s390 = sphi 0, %s389
      %s406 = sphi 0, %s390
    $region4: #{tpu_custom_call.1} parent=1 // loop_header_branch
      %28 = sbr.rel (%p26) target = $region8
    $region5: #{tpu_custom_call.1} parent=1 // loop_body
      %s30 = ssub.s32 %s25, 1
      %s31 = ssub.s32 %s25, 2
      %s32 = sadd.s32 %s25, 1
      %s33 = ssub.s32 %s25, %s32
      %p34 = scmp.eq.s32.totalorder %s33, 0
      %s36 = sadd.s32 %s35, 1
      %s37 = scalar_select %p34, %s35, %s36
      %p40 = pneg %p34
      %p41 = scmp.eq.s32.totalorder %s25, 1
      %p42 = por %p40, %p41
      %p43 = scmp.ne.s32.totalorder %s35, %s38
      %p44 = scmp.eq.s32.totalorder %s25, 0
      %p45 = por %p43, %p44
      %p46 = scmp.ne.s32.totalorder %s35, %s38
      %p47 = scmp.eq.s32.totalorder %s30, 1
      %p48 = por %p46, %p47
      %p49 = scmp.ne.s32.totalorder %s38, %s39
      %p50 = scmp.eq.s32.totalorder %s30, 0
      %p51 = por %p49, %p50
      %p52 = scmp.ne.s32.totalorder %s38, %s39
      %p53 = scmp.eq.s32.totalorder %s31, 1
      %p54 = por %p52, %p53
      %p56 = scmp.ne.s32.totalorder %s39, %s55
      %p57 = scmp.eq.s32.totalorder %s31, 0
      %p58 = por %p56, %p57
      %s59 = ssub.s32 %s25, %s32
      %p60 = scmp.eq.s32.totalorder %s59, 0
      %s62 = sadd.s32 %s61, 1
      %s63 = scalar_select %p60, %s61, %s62
      %p66 = pneg %p60
      %p67 = scmp.eq.s32.totalorder %s25, 1
      %p68 = por %p66, %p67
      %p69 = scmp.ne.s32.totalorder %s61, %s64
      %p70 = scmp.eq.s32.totalorder %s25, 0
      %p71 = por %p69, %p70
      %p72 = scmp.ne.s32.totalorder %s61, %s64
      %p73 = scmp.eq.s32.totalorder %s30, 1
      %p74 = por %p72, %p73
      %p75 = scmp.ne.s32.totalorder %s64, %s65
      %p76 = scmp.eq.s32.totalorder %s30, 0
      %p77 = por %p75, %p76
      %p78 = scmp.ne.s32.totalorder %s64, %s65
      %p79 = scmp.eq.s32.totalorder %s31, 1
      %p80 = por %p78, %p79
      %p82 = scmp.ne.s32.totalorder %s65, %s81
      %p83 = scmp.eq.s32.totalorder %s31, 0
      %p84 = por %p82, %p83
      %s85 = ssub.s32 %s25, %s32
      %p86 = scmp.eq.s32.totalorder %s85, 0
      %s88 = sadd.s32 %s87, 1
      %s89 = scalar_select %p86, %s87, %s88
      %p92 = pneg %p86
      %p93 = scmp.eq.s32.totalorder %s25, 1
      %p94 = por %p92, %p93
      %p95 = scmp.ne.s32.totalorder %s87, %s90
      %p96 = scmp.eq.s32.totalorder %s25, 0
      %p97 = por %p95, %p96
      %p98 = scmp.ne.s32.totalorder %s87, %s90
      %p99 = scmp.eq.s32.totalorder %s30, 1
      %p100 = por %p98, %p99
      %p101 = scmp.ne.s32.totalorder %s90, %s91
      %p102 = scmp.eq.s32.totalorder %s30, 0
      %p103 = por %p101, %p102
      %p104 = scmp.ne.s32.totalorder %s90, %s91
      %p105 = scmp.eq.s32.totalorder %s31, 1
      %p106 = por %p104, %p105
      %p108 = scmp.ne.s32.totalorder %s91, %s107
      %p109 = scmp.eq.s32.totalorder %s31, 0
      %p110 = por %p108, %p109
      %s112 = sadd.s32 %s111, 1
      %p115 = scmp.eq.s32.totalorder %s25, 1
      %p116 = scmp.ne.s32.totalorder %s111, %s113
      %p117 = scmp.eq.s32.totalorder %s25, 0
      %p118 = por %p116, %p117
      %p119 = scmp.ne.s32.totalorder %s111, %s113
      %p120 = scmp.eq.s32.totalorder %s30, 1
      %p121 = por %p119, %p120
      %p122 = scmp.ne.s32.totalorder %s113, %s114
      %p123 = scmp.eq.s32.totalorder %s30, 0
      %p124 = por %p122, %p123
      %p125 = scmp.ne.s32.totalorder %s113, %s114
      %p126 = scmp.eq.s32.totalorder %s31, 1
      %p127 = por %p125, %p126
      %p129 = scmp.ne.s32.totalorder %s114, %s128
      %p130 = scmp.eq.s32.totalorder %s31, 0
      %p131 = por %p129, %p130
      %s133 = sadd.s32 %s132, 1
      %p136 = scmp.eq.s32.totalorder %s25, 1
      %p137 = scmp.ne.s32.totalorder %s132, %s134
      %p138 = scmp.eq.s32.totalorder %s25, 0
      %p139 = por %p137, %p138
      %p140 = scmp.ne.s32.totalorder %s132, %s134
      %p141 = scmp.eq.s32.totalorder %s30, 1
      %p142 = por %p140, %p141
      %p143 = scmp.ne.s32.totalorder %s134, %s135
      %p144 = scmp.eq.s32.totalorder %s30, 0
      %p145 = por %p143, %p144
      %p146 = scmp.ne.s32.totalorder %s134, %s135
      %p147 = scmp.eq.s32.totalorder %s31, 1
      %p148 = por %p146, %p147
      %p150 = scmp.ne.s32.totalorder %s135, %s149
      %p151 = scmp.eq.s32.totalorder %s31, 0
      %p152 = por %p150, %p151
      %s154 = sadd.s32 %s153, 1
      %p157 = scmp.eq.s32.totalorder %s25, 1
      %p158 = scmp.ne.s32.totalorder %s153, %s155
      %p159 = scmp.eq.s32.totalorder %s25, 0
      %p160 = por %p158, %p159
      %p161 = scmp.ne.s32.totalorder %s153, %s155
      %p162 = scmp.eq.s32.totalorder %s30, 1
      %p163 = por %p161, %p162
      %p164 = scmp.ne.s32.totalorder %s155, %s156
      %p165 = scmp.eq.s32.totalorder %s30, 0
      %p166 = por %p164, %p165
      %p167 = scmp.ne.s32.totalorder %s155, %s156
      %p168 = scmp.eq.s32.totalorder %s31, 1
      %p169 = por %p167, %p168
      %p171 = scmp.ne.s32.totalorder %s156, %s170
      %p172 = scmp.eq.s32.totalorder %s31, 0
      %p173 = por %p171, %p172
      %s175 = sadd.s32 %s174, 1
      %p178 = scmp.eq.s32.totalorder %s25, 1
      %p179 = scmp.ne.s32.totalorder %s174, %s176
      %p180 = scmp.eq.s32.totalorder %s25, 0
      %p181 = por %p179, %p180
      %p182 = scmp.ne.s32.totalorder %s174, %s176
      %p183 = scmp.eq.s32.totalorder %s30, 1
      %p184 = por %p182, %p183
      %p185 = scmp.ne.s32.totalorder %s176, %s177
      %p186 = scmp.eq.s32.totalorder %s30, 0
      %p187 = por %p185, %p186
      %p188 = scmp.ne.s32.totalorder %s176, %s177
      %p189 = scmp.eq.s32.totalorder %s31, 1
      %p190 = por %p188, %p189
      %p192 = scmp.ne.s32.totalorder %s177, %s191
      %p193 = scmp.eq.s32.totalorder %s31, 0
      %p194 = por %p192, %p193
      %s196 = sadd.s32 %s195, 1
      %p199 = scmp.eq.s32.totalorder %s25, 1
      %p200 = scmp.ne.s32.totalorder %s195, %s197
      %p201 = scmp.eq.s32.totalorder %s25, 0
      %p202 = por %p200, %p201
      %p203 = scmp.ne.s32.totalorder %s195, %s197
      %p204 = scmp.eq.s32.totalorder %s30, 1
      %p205 = por %p203, %p204
      %p206 = scmp.ne.s32.totalorder %s197, %s198
      %p207 = scmp.eq.s32.totalorder %s30, 0
      %p208 = por %p206, %p207
      %p209 = scmp.ne.s32.totalorder %s197, %s198
      %p210 = scmp.eq.s32.totalorder %s31, 1
      %p211 = por %p209, %p210
      %p213 = scmp.ne.s32.totalorder %s198, %s212
      %p214 = scmp.eq.s32.totalorder %s31, 0
      %p215 = por %p213, %p214
      %s217 = sadd.s32 %s216, 1
      %p220 = scmp.eq.s32.totalorder %s25, 1
      %p221 = scmp.ne.s32.totalorder %s216, %s218
      %p222 = scmp.eq.s32.totalorder %s25, 0
      %p223 = por %p221, %p222
      %p224 = scmp.ne.s32.totalorder %s216, %s218
      %p225 = scmp.eq.s32.totalorder %s30, 1
      %p226 = por %p224, %p225
      %p227 = scmp.ne.s32.totalorder %s218, %s219
      %p228 = scmp.eq.s32.totalorder %s30, 0
      %p229 = por %p227, %p228
      %p230 = scmp.ne.s32.totalorder %s218, %s219
      %p231 = scmp.eq.s32.totalorder %s31, 1
      %p232 = por %p230, %p231
      %p234 = scmp.ne.s32.totalorder %s219, %s233
      %p235 = scmp.eq.s32.totalorder %s31, 0
      %p236 = por %p234, %p235
      %s238 = sadd.s32 %s237, 1
      %p241 = scmp.eq.s32.totalorder %s25, 1
      %p242 = scmp.ne.s32.totalorder %s237, %s239
      %p243 = scmp.eq.s32.totalorder %s25, 0
      %p244 = por %p242, %p243
      %p245 = scmp.ne.s32.totalorder %s237, %s239
      %p246 = scmp.eq.s32.totalorder %s30, 1
      %p247 = por %p245, %p246
      %p248 = scmp.ne.s32.totalorder %s239, %s240
      %p249 = scmp.eq.s32.totalorder %s30, 0
      %p250 = por %p248, %p249
      %p251 = scmp.ne.s32.totalorder %s239, %s240
      %p252 = scmp.eq.s32.totalorder %s31, 1
      %p253 = por %p251, %p252
      %p255 = scmp.ne.s32.totalorder %s240, %s254
      %p256 = scmp.eq.s32.totalorder %s31, 0
      %p257 = por %p255, %p256
      %s259 = sadd.s32 %s258, 1
      %p262 = scmp.eq.s32.totalorder %s25, 1
      %p263 = scmp.ne.s32.totalorder %s258, %s260
      %p264 = scmp.eq.s32.totalorder %s25, 0
      %p265 = por %p263, %p264
      %p266 = scmp.ne.s32.totalorder %s258, %s260
      %p267 = scmp.eq.s32.totalorder %s30, 1
      %p268 = por %p266, %p267
      %p269 = scmp.ne.s32.totalorder %s260, %s261
      %p270 = scmp.eq.s32.totalorder %s30, 0
      %p271 = por %p269, %p270
      %p272 = scmp.ne.s32.totalorder %s260, %s261
      %p273 = scmp.eq.s32.totalorder %s31, 1
      %p274 = por %p272, %p273
      %p276 = scmp.ne.s32.totalorder %s261, %s275
      %p277 = scmp.eq.s32.totalorder %s31, 0
      %p278 = por %p276, %p277
      %s280 = sadd.s32 %s279, 1
      %p283 = scmp.eq.s32.totalorder %s25, 1
      %p284 = scmp.ne.s32.totalorder %s279, %s281
      %p285 = scmp.eq.s32.totalorder %s25, 0
      %p286 = por %p284, %p285
      %p287 = scmp.ne.s32.totalorder %s279, %s281
      %p288 = scmp.eq.s32.totalorder %s30, 1
      %p289 = por %p287, %p288
      %p290 = scmp.ne.s32.totalorder %s281, %s282
      %p291 = scmp.eq.s32.totalorder %s30, 0
      %p292 = por %p290, %p291
      %p293 = scmp.ne.s32.totalorder %s281, %s282
      %p294 = scmp.eq.s32.totalorder %s31, 1
      %p295 = por %p293, %p294
      %p297 = scmp.ne.s32.totalorder %s282, %s296
      %p298 = scmp.eq.s32.totalorder %s31, 0
      %p299 = por %p297, %p298
      %s301 = sadd.s32 %s300, 1
      %p304 = scmp.eq.s32.totalorder %s25, 1
      %p305 = scmp.ne.s32.totalorder %s300, %s302
      %p306 = scmp.eq.s32.totalorder %s25, 0
      %p307 = por %p305, %p306
      %p308 = scmp.ne.s32.totalorder %s300, %s302
      %p309 = scmp.eq.s32.totalorder %s30, 1
      %p310 = por %p308, %p309
      %p311 = scmp.ne.s32.totalorder %s302, %s303
      %p312 = scmp.eq.s32.totalorder %s30, 0
      %p313 = por %p311, %p312
      %p314 = scmp.ne.s32.totalorder %s302, %s303
      %p315 = scmp.eq.s32.totalorder %s31, 1
      %p316 = por %p314, %p315
      %p318 = scmp.ne.s32.totalorder %s303, %s317
      %p319 = scmp.eq.s32.totalorder %s31, 0
      %p320 = por %p318, %p319
      %s322 = sadd.s32 %s321, 1
      %p325 = scmp.eq.s32.totalorder %s25, 1
      %p326 = scmp.ne.s32.totalorder %s321, %s323
      %p327 = scmp.eq.s32.totalorder %s25, 0
      %p328 = por %p326, %p327
      %p329 = scmp.ne.s32.totalorder %s321, %s323
      %p330 = scmp.eq.s32.totalorder %s30, 1
      %p331 = por %p329, %p330
      %p332 = scmp.ne.s32.totalorder %s323, %s324
      %p333 = scmp.eq.s32.totalorder %s30, 0
      %p334 = por %p332, %p333
      %p335 = scmp.ne.s32.totalorder %s323, %s324
      %p336 = scmp.eq.s32.totalorder %s31, 1
      %p337 = por %p335, %p336
      %p339 = scmp.ne.s32.totalorder %s324, %s338
      %p340 = scmp.eq.s32.totalorder %s31, 0
      %p341 = por %p339, %p340
      %s343 = sadd.s32 %s342, 1
      %p346 = scmp.eq.s32.totalorder %s25, 1
      %p347 = scmp.ne.s32.totalorder %s342, %s344
      %p348 = scmp.eq.s32.totalorder %s25, 0
      %p349 = por %p347, %p348
      %p350 = scmp.ne.s32.totalorder %s342, %s344
      %p351 = scmp.eq.s32.totalorder %s30, 1
      %p352 = por %p350, %p351
      %p353 = scmp.ne.s32.totalorder %s344, %s345
      %p354 = scmp.eq.s32.totalorder %s30, 0
      %p355 = por %p353, %p354
      %p356 = scmp.ne.s32.totalorder %s344, %s345
      %p357 = scmp.eq.s32.totalorder %s31, 1
      %p358 = por %p356, %p357
      %p360 = scmp.ne.s32.totalorder %s345, %s359
      %p361 = scmp.eq.s32.totalorder %s31, 0
      %p362 = por %p360, %p361
      %s364 = sadd.s32 %s363, 1
      %p367 = scmp.eq.s32.totalorder %s25, 1
      %p368 = scmp.ne.s32.totalorder %s363, %s365
      %p369 = scmp.eq.s32.totalorder %s25, 0
      %p370 = por %p368, %p369
      %p371 = scmp.ne.s32.totalorder %s363, %s365
      %p372 = scmp.eq.s32.totalorder %s30, 1
      %p373 = por %p371, %p372
      %p374 = scmp.ne.s32.totalorder %s365, %s366
      %p375 = scmp.eq.s32.totalorder %s30, 0
      %p376 = por %p374, %p375
      %p377 = scmp.ne.s32.totalorder %s365, %s366
      %p378 = scmp.eq.s32.totalorder %s31, 1
      %p379 = por %p377, %p378
      %p381 = scmp.ne.s32.totalorder %s366, %s380
      %p382 = scmp.eq.s32.totalorder %s31, 0
      %p383 = por %p381, %p382
      %s384 = ssub.s32 %s25, %s32
      %p385 = scmp.eq.s32.totalorder %s384, 0
      %s387 = sadd.s32 %s386, 1
      %s388 = scalar_select %p385, %s386, %s387
      %p391 = pneg %p385
      %p392 = scmp.eq.s32.totalorder %s25, 1
      %p393 = por %p391, %p392
      %p394 = scmp.ne.s32.totalorder %s386, %s389
      %p395 = scmp.eq.s32.totalorder %s25, 0
      %p396 = por %p394, %p395
      %p397 = scmp.ne.s32.totalorder %s386, %s389
      %p398 = scmp.eq.s32.totalorder %s30, 1
      %p399 = por %p397, %p398
      %p400 = scmp.ne.s32.totalorder %s389, %s390
      %p401 = scmp.eq.s32.totalorder %s30, 0
      %p402 = por %p400, %p401
      %p403 = scmp.ne.s32.totalorder %s389, %s390
      %p404 = scmp.eq.s32.totalorder %s31, 1
      %p405 = por %p403, %p404
      %p407 = scmp.ne.s32.totalorder %s390, %s406
      %p408 = scmp.eq.s32.totalorder %s31, 0
      %p409 = por %p407, %p408
      %p410 = scmp.le.s32.totalorder 1, %s25
      %p411 = scmp.lt.s32.totalorder %s25, 3
      %p412 = pnand %p410, %p411
      %p413 = pneg %p412
      // Predicated region
      $region9: #{tpu_custom_call.1} parent=5 // pred_check
        _
      $region10: #{tpu_custom_call.1} parent=5 // pred_check_branch
        %415 = sbr.rel (%p412) target = $region12
      $region11: #{tpu_custom_call.1} parent=5 // pred_region
        %s416 = ssub.s32 %s25, 1
        // Predicated region
        $region13: #{tpu_custom_call.1} parent=11 // pred_check
          %p417 = pneg %p124
        $region14: #{tpu_custom_call.1} parent=11 // pred_check_branch
          %419 = sbr.rel (%p417) target = $region16
        $region15: #{tpu_custom_call.1} parent=11 // pred_region
          _
        $region16: #{tpu_custom_call.1} parent=11 // pred_fallthru
          _
        // Predicated region
        $region17: #{tpu_custom_call.1} parent=11 // pred_check
          %p420 = pneg %p145
        $region18: #{tpu_custom_call.1} parent=11 // pred_check_branch
          %422 = sbr.rel (%p420) target = $region20
        $region19: #{tpu_custom_call.1} parent=11 // pred_region
          _
        $region20: #{tpu_custom_call.1} parent=11 // pred_fallthru
          _
        // Predicated region
        $region21: #{tpu_custom_call.1} parent=11 // pred_check
          %p423 = pneg %p166
        $region22: #{tpu_custom_call.1} parent=11 // pred_check_branch
          %425 = sbr.rel (%p423) target = $region24
        $region23: #{tpu_custom_call.1} parent=11 // pred_region
          _
        $region24: #{tpu_custom_call.1} parent=11 // pred_fallthru
          _
        // Predicated region
        $region25: #{tpu_custom_call.1} parent=11 // pred_check
          %p426 = pneg %p187
        $region26: #{tpu_custom_call.1} parent=11 // pred_check_branch
          %428 = sbr.rel (%p426) target = $region28
        $region27: #{tpu_custom_call.1} parent=11 // pred_region
          _
        $region28: #{tpu_custom_call.1} parent=11 // pred_fallthru
          _
        // Predicated region
        $region29: #{tpu_custom_call.1} parent=11 // pred_check
          %p429 = pneg %p208
        $region30: #{tpu_custom_call.1} parent=11 // pred_check_branch
          %431 = sbr.rel (%p429) target = $region32
        $region31: #{tpu_custom_call.1} parent=11 // pred_region
          _
        $region32: #{tpu_custom_call.1} parent=11 // pred_fallthru
          _
        // Predicated region
        $region33: #{tpu_custom_call.1} parent=11 // pred_check
          %p432 = pneg %p229
        $region34: #{tpu_custom_call.1} parent=11 // pred_check_branch
          %434 = sbr.rel (%p432) target = $region36
        $region35: #{tpu_custom_call.1} parent=11 // pred_region
          _
        $region36: #{tpu_custom_call.1} parent=11 // pred_fallthru
          _
        // Predicated region
        $region37: #{tpu_custom_call.1} parent=11 // pred_check
          %p435 = pneg %p250
        $region38: #{tpu_custom_call.1} parent=11 // pred_check_branch
          %437 = sbr.rel (%p435) target = $region40
        $region39: #{tpu_custom_call.1} parent=11 // pred_region
          _
        $region40: #{tpu_custom_call.1} parent=11 // pred_fallthru
          _
        // Predicated region
        $region41: #{tpu_custom_call.1} parent=11 // pred_check
          %p438 = pneg %p271
        $region42: #{tpu_custom_call.1} parent=11 // pred_check_branch
          %440 = sbr.rel (%p438) target = $region44
        $region43: #{tpu_custom_call.1} parent=11 // pred_region
          _
        $region44: #{tpu_custom_call.1} parent=11 // pred_fallthru
          _
        // Predicated region
        $region45: #{tpu_custom_call.1} parent=11 // pred_check
          %p441 = pneg %p292
        $region46: #{tpu_custom_call.1} parent=11 // pred_check_branch
          %443 = sbr.rel (%p441) target = $region48
        $region47: #{tpu_custom_call.1} parent=11 // pred_region
          _
        $region48: #{tpu_custom_call.1} parent=11 // pred_fallthru
          _
        // Predicated region
        $region49: #{tpu_custom_call.1} parent=11 // pred_check
          %p444 = pneg %p313
        $region50: #{tpu_custom_call.1} parent=11 // pred_check_branch
          %446 = sbr.rel (%p444) target = $region52
        $region51: #{tpu_custom_call.1} parent=11 // pred_region
          _
        $region52: #{tpu_custom_call.1} parent=11 // pred_fallthru
          _
        // Predicated region
        $region53: #{tpu_custom_call.1} parent=11 // pred_check
          %p447 = pneg %p334
        $region54: #{tpu_custom_call.1} parent=11 // pred_check_branch
          %449 = sbr.rel (%p447) target = $region56
        $region55: #{tpu_custom_call.1} parent=11 // pred_region
          _
        $region56: #{tpu_custom_call.1} parent=11 // pred_fallthru
          _
        // Predicated region
        $region57: #{tpu_custom_call.1} parent=11 // pred_check
          %p450 = pneg %p355
        $region58: #{tpu_custom_call.1} parent=11 // pred_check_branch
          %452 = sbr.rel (%p450) target = $region60
        $region59: #{tpu_custom_call.1} parent=11 // pred_region
          _
        $region60: #{tpu_custom_call.1} parent=11 // pred_fallthru
          _
        // Predicated region
        $region61: #{tpu_custom_call.1} parent=11 // pred_check
          %p453 = pneg %p376
        $region62: #{tpu_custom_call.1} parent=11 // pred_check_branch
          %455 = sbr.rel (%p453) target = $region64
        $region63: #{tpu_custom_call.1} parent=11 // pred_region
          _
        $region64: #{tpu_custom_call.1} parent=11 // pred_fallthru
          _
      $region12: #{tpu_custom_call.1} parent=5 // pred_fallthru
        _
      %p456 = scmp.lt.s32.totalorder %s25, 2
      // Predicated region
      $region65: #{tpu_custom_call.1} parent=5 // pred_check
        %p457 = pneg %p456
      $region66: #{tpu_custom_call.1} parent=5 // pred_check_branch
        %459 = sbr.rel (%p457) target = $region68
      $region67: #{tpu_custom_call.1} parent=5 // pred_region
        // Predicated region
        $region69: #{tpu_custom_call.1} parent=67 // pred_check
          %p460 = pneg %p45
        $region70: #{tpu_custom_call.1} parent=67 // pred_check_branch
          %462 = sbr.rel (%p460) target = $region72
        $region71: #{tpu_custom_call.1} parent=67 // pred_region
          %p463 = scmp.lt.s32.totalorder %s25, 1
          %s464 = scalar_select %p463, %s25, 1
          %s465 = smul.addr %s464, 8
          %s466 = scalar_lea.vmem %s0, %s465
        $region72: #{tpu_custom_call.1} parent=67 // pred_fallthru
          _
        // Predicated region
        $region73: #{tpu_custom_call.1} parent=67 // pred_check
          %p467 = pneg %p71
        $region74: #{tpu_custom_call.1} parent=67 // pred_check_branch
          %469 = sbr.rel (%p467) target = $region76
        $region75: #{tpu_custom_call.1} parent=67 // pred_region
          %p470 = scmp.lt.s32.totalorder %s25, 1
          %s471 = scalar_select %p470, %s25, 1
          %s472 = smul.addr %s471, 8
          %s473 = scalar_lea.vmem %s1, %s472
        $region76: #{tpu_custom_call.1} parent=67 // pred_fallthru
          _
        // Predicated region
        $region77: #{tpu_custom_call.1} parent=67 // pred_check
          %p474 = pneg %p97
        $region78: #{tpu_custom_call.1} parent=67 // pred_check_branch
          %476 = sbr.rel (%p474) target = $region80
        $region79: #{tpu_custom_call.1} parent=67 // pred_region
          %p477 = scmp.lt.s32.totalorder %s25, 1
          %s478 = scalar_select %p477, %s25, 1
          %s479 = smul.addr %s478, 8
          %s480 = scalar_lea.vmem %s2, %s479
        $region80: #{tpu_custom_call.1} parent=67 // pred_fallthru
          _
      $region68: #{tpu_custom_call.1} parent=5 // pred_fallthru
        _
      %p481 = scmp.le.s32.totalorder 1, %s25
      %p482 = scmp.lt.s32.totalorder %s25, 3
      %p483 = pnand %p481, %p482
      %p484 = pneg %p483
      // Predicated region
      $region81: #{tpu_custom_call.1} parent=5 // pred_check
        _
      $region82: #{tpu_custom_call.1} parent=5 // pred_check_branch
        %486 = sbr.rel (%p483) target = $region84
      $region83: #{tpu_custom_call.1} parent=5 // pred_region
        %s487 = ssub.s32 %s25, 1
        %p488 = scmp.lt.s32.totalorder %s30, 1
        %s489 = scalar_select %p488, %s30, 1
        %s490 = smul.addr %s489, 8
        %s491 = scalar_lea.vmem %s0, %s490
        %p492 = pneg %p51
        %p493 = pneg %p48
        %p494 = scmp.lt.s32.totalorder %s30, 1
        %s495 = scalar_select %p494, %s30, 1
        %s496 = smul.addr %s495, 8
        %s497 = scalar_lea.vmem %s1, %s496
        %p498 = pneg %p77
        %p499 = pneg %p74
        %p500 = scmp.lt.s32.totalorder %s30, 1
        %s501 = scalar_select %p500, %s30, 1
        %s502 = smul.addr %s501, 8
        %s503 = scalar_lea.vmem %s2, %s502
        %p504 = pneg %p103
        %p505 = pneg %p100
        %p506 = pneg %p124
        %p507 = pneg %p121
        %p508 = pneg %p145
        %p509 = pneg %p142
        %p510 = pneg %p166
        %p511 = pneg %p163
        %p512 = pneg %p187
        %p513 = pneg %p184
        %p514 = pneg %p208
        %p515 = pneg %p205
        %p516 = pneg %p229
        %p517 = pneg %p226
        %p518 = pneg %p250
        %p519 = pneg %p247
        %p520 = pneg %p271
        %p521 = pneg %p268
        %p522 = pneg %p292
        %p523 = pneg %p289
        %p524 = pneg %p313
        %p525 = pneg %p310
        %p526 = pneg %p334
        %p527 = pneg %p331
        %p528 = pneg %p355
        %p529 = pneg %p352
        %p530 = pneg %p376
        %p531 = pneg %p373
        %p532 = pneg %p402
        %p533 = pneg %p399
        %s534 = sand.u32 %s389, 1
        %s535 = scalar_lea.sflag [#allocation4], %s534
        %s536 = sand.u32 %s389, 1
        %s537 = smul.addr %s536, 8
        %s538 = scalar_lea.vmem [#allocation3], %s537
        %p539 = scmp.lt.s32.totalorder %s30, 1
        %s540 = scalar_select %p539, %s30, 1
        %s541 = smul.addr %s540, 8
        %s542 = scalar_lea.vmem %s0, %s541
        %p543 = scmp.lt.s32.totalorder %s30, 1
        %s544 = scalar_select %p543, %s30, 1
        %s545 = smul.addr %s544, 8
        %s546 = scalar_lea.vmem %s1, %s545
        %p547 = scmp.lt.s32.totalorder %s30, 1
        %s548 = scalar_select %p547, %s30, 1
        %s549 = smul.addr %s548, 8
        %s550 = scalar_lea.vmem %s2, %s549
        %v551 = vld [vmem:[%s542] sm:$0xff]
        %v552 = vld [vmem:[%s546] sm:$0xff]
        %v553 = vld [vmem:[%s550] sm:$0xff]
        %v554 = vld [vmem:[%s5] sm:$0xff]
        %v555 = vld [vmem:[%s5 + $0x8] sm:$0xff]
        %v556 = vld [vmem:[%s5 + $0x10] sm:$0xff]
        %v557 = vld [vmem:[%s5 + $0x18] sm:$0xff]
        %v558 = vld [vmem:[%s5 + $0x20] sm:$0xff]
        %v559 = vld [vmem:[%s5 + $0x28] sm:$0xff]
        %v560 = vld [vmem:[%s5 + $0x30] sm:$0xff]
        %v561 = vld [vmem:[%s5 + $0x38] sm:$0xff]
        %v562 = vld [vmem:[%s5 + $0x40] sm:$0xff]
        %v563 = vld [vmem:[%s5 + $0x48] sm:$0xff]
        %v564 = vld [vmem:[%s5 + $0x50] sm:$0xff]
        %v565 = vld [vmem:[%s5 + $0x58] sm:$0xff]
        %v566 = vld [vmem:[%s5 + $0x60] sm:$0xff]
        %v567 = vld [vmem:[%s5 + $0x68] sm:$0xff]
        %v568 = vld [vmem:[%s5 + $0x70] sm:$0xff]
        %v569 = vld [vmem:[%s5 + $0x78] sm:$0xff]
        %v570 = vld [vmem:[%s6] sm:$0x1]
        %v572 = vlaneseq
        %v573 = vshrl.u32 %v572, 7
        %v574 = vsub.s32 0, %v573
        %v575 = vrot.slane %v570, %v574
        %577 = vmatprep.subr.mxu0 0.0
        %578 = vmatpush1.msra.mxu0 %v554
        %579 = vmatprep.subr.mxu0 0.0
        %580 = vmatpush1.msra.mxu0 %v555
        %581 = vmatprep.subr.mxu0 0.0
        %582 = vmatpush1.msra.mxu0 %v556
        %583 = vmatprep.subr.mxu0 0.0
        %584 = vmatpush1.msra.mxu0 %v557
        %585 = vmatprep.subr.mxu0 0.0
        %586 = vmatpush1.msra.mxu0 %v558
        %587 = vmatprep.subr.mxu0 0.0
        %588 = vmatpush1.msra.mxu0 %v559
        %589 = vmatprep.subr.mxu0 0.0
        %590 = vmatpush1.msra.mxu0 %v560
        %591 = vmatprep.subr.mxu0 0.0
        %592 = vmatpush1.msra.mxu0 %v561
        %593 = vmatprep.subr.mxu0 0.0
        %594 = vmatpush1.msra.mxu0 %v562
        %595 = vmatprep.subr.mxu0 0.0
        %596 = vmatpush1.msra.mxu0 %v563
        %597 = vmatprep.subr.mxu0 0.0
        %598 = vmatpush1.msra.mxu0 %v564
        %599 = vmatprep.subr.mxu0 0.0
        %600 = vmatpush1.msra.mxu0 %v565
        %601 = vmatprep.subr.mxu0 0.0
        %602 = vmatpush1.msra.mxu0 %v566
        %603 = vmatprep.subr.mxu0 0.0
        %604 = vmatpush1.msra.mxu0 %v567
        %605 = vmatprep.subr.mxu0 0.0
        %606 = vmatpush1.msra.mxu0 %v568
        %607 = vmatprep.subr.mxu0 0.0
        %608 = vmatpush1.msra.mxu0 %v569
        %609 = vmatprep.subr.mxu0 0.0
        %610 = vmatpush1.msra.mxu0 0.0
        %611 = vmatprep.subr.mxu0 0.0
        %612 = vmatpush1.msra.mxu0 0.0
        %613 = vmatprep.subr.mxu0 0.0
        %614 = vmatpush1.msra.mxu0 0.0
        %615 = vmatprep.subr.mxu0 0.0
        %616 = vmatpush1.msra.mxu0 0.0
        %617 = vmatprep.subr.mxu0 0.0
        %618 = vmatpush1.msra.mxu0 0.0
        %619 = vmatprep.subr.mxu0 0.0
        %620 = vmatpush1.msra.mxu0 0.0
        %621 = vmatprep.subr.mxu0 0.0
        %622 = vmatpush1.msra.mxu0 0.0
        %623 = vmatprep.subr.mxu0 0.0
        %624 = vmatpush1.msra.mxu0 0.0
        %625 = vmatprep.subr.mxu0 0.0
        %626 = vmatpush1.msra.mxu0 0.0
        %627 = vmatprep.subr.mxu0 0.0
        %628 = vmatpush1.msra.mxu0 0.0
        %629 = vmatprep.subr.mxu0 0.0
        %630 = vmatpush1.msra.mxu0 0.0
        %631 = vmatprep.subr.mxu0 0.0
        %632 = vmatpush1.msra.mxu0 0.0
        %633 = vmatprep.subr.mxu0 0.0
        %634 = vmatpush1.msra.mxu0 0.0
        %635 = vmatprep.subr.mxu0 0.0
        %636 = vmatpush1.msra.mxu0 0.0
        %637 = vmatprep.subr.mxu0 0.0
        %638 = vmatpush1.msra.mxu0 0.0
        %639 = vmatprep.subr.mxu0 0.0
        %640 = vmatpush1.msra.mxu0 0.0
        %641 = vmatprep.mubr.f32.mxu0 0.0
        %642 = vmatmul.mubr.f32.gmra.mrb[0].mxu0 %v551
        %v643 = vpop.f32.mrb[0].mxu0
        %v644 = vadd.f32 %v575, %v643
        %v645 = vpop.f32.mrb[0].mxu0
        %646 = vdwg.mxu0
        %v647 = vld [vmem:[%s7] sm:$0xff]
        %v648 = vld [vmem:[%s7 + $0x8] sm:$0xff]
        %v649 = vld [vmem:[%s7 + $0x10] sm:$0xff]
        %v650 = vld [vmem:[%s7 + $0x18] sm:$0xff]
        %v651 = vld [vmem:[%s7 + $0x20] sm:$0xff]
        %v652 = vld [vmem:[%s7 + $0x28] sm:$0xff]
        %v653 = vld [vmem:[%s7 + $0x30] sm:$0xff]
        %v654 = vld [vmem:[%s7 + $0x38] sm:$0xff]
        %v655 = vld [vmem:[%s7 + $0x40] sm:$0xff]
        %v656 = vld [vmem:[%s7 + $0x48] sm:$0xff]
        %v657 = vld [vmem:[%s7 + $0x50] sm:$0xff]
        %v658 = vld [vmem:[%s7 + $0x58] sm:$0xff]
        %v659 = vld [vmem:[%s7 + $0x60] sm:$0xff]
        %v660 = vld [vmem:[%s7 + $0x68] sm:$0xff]
        %v661 = vld [vmem:[%s7 + $0x70] sm:$0xff]
        %v662 = vld [vmem:[%s7 + $0x78] sm:$0xff]
        %v663 = vld [vmem:[%s8] sm:$0x1]
        %v665 = vlaneseq
        %v666 = vshrl.u32 %v665, 7
        %v667 = vsub.s32 0, %v666
        %v668 = vrot.slane %v663, %v667
        %670 = vmatprep.subr.mxu0 0.0
        %671 = vmatpush1.msra.mxu0 %v647
        %672 = vmatprep.subr.mxu0 0.0
        %673 = vmatpush1.msra.mxu0 %v648
        %674 = vmatprep.subr.mxu0 0.0
        %675 = vmatpush1.msra.mxu0 %v649
        %676 = vmatprep.subr.mxu0 0.0
        %677 = vmatpush1.msra.mxu0 %v650
        %678 = vmatprep.subr.mxu0 0.0
        %679 = vmatpush1.msra.mxu0 %v651
        %680 = vmatprep.subr.mxu0 0.0
        %681 = vmatpush1.msra.mxu0 %v652
        %682 = vmatprep.subr.mxu0 0.0
        %683 = vmatpush1.msra.mxu0 %v653
        %684 = vmatprep.subr.mxu0 0.0
        %685 = vmatpush1.msra.mxu0 %v654
        %686 = vmatprep.subr.mxu0 0.0
        %687 = vmatpush1.msra.mxu0 %v655
        %688 = vmatprep.subr.mxu0 0.0
        %689 = vmatpush1.msra.mxu0 %v656
        %690 = vmatprep.subr.mxu0 0.0
        %691 = vmatpush1.msra.mxu0 %v657
        %692 = vmatprep.subr.mxu0 0.0
        %693 = vmatpush1.msra.mxu0 %v658
        %694 = vmatprep.subr.mxu0 0.0
        %695 = vmatpush1.msra.mxu0 %v659
        %696 = vmatprep.subr.mxu0 0.0
        %697 = vmatpush1.msra.mxu0 %v660
        %698 = vmatprep.subr.mxu0 0.0
        %699 = vmatpush1.msra.mxu0 %v661
        %700 = vmatprep.subr.mxu0 0.0
        %701 = vmatpush1.msra.mxu0 %v662
        %702 = vmatprep.subr.mxu0 0.0
        %703 = vmatpush1.msra.mxu0 0.0
        %704 = vmatprep.subr.mxu0 0.0
        %705 = vmatpush1.msra.mxu0 0.0
        %706 = vmatprep.subr.mxu0 0.0
        %707 = vmatpush1.msra.mxu0 0.0
        %708 = vmatprep.subr.mxu0 0.0
        %709 = vmatpush1.msra.mxu0 0.0
        %710 = vmatprep.subr.mxu0 0.0
        %711 = vmatpush1.msra.mxu0 0.0
        %712 = vmatprep.subr.mxu0 0.0
        %713 = vmatpush1.msra.mxu0 0.0
        %714 = vmatprep.subr.mxu0 0.0
        %715 = vmatpush1.msra.mxu0 0.0
        %716 = vmatprep.subr.mxu0 0.0
        %717 = vmatpush1.msra.mxu0 0.0
        %718 = vmatprep.subr.mxu0 0.0
        %719 = vmatpush1.msra.mxu0 0.0
        %720 = vmatprep.subr.mxu0 0.0
        %721 = vmatpush1.msra.mxu0 0.0
        %722 = vmatprep.subr.mxu0 0.0
        %723 = vmatpush1.msra.mxu0 0.0
        %724 = vmatprep.subr.mxu0 0.0
        %725 = vmatpush1.msra.mxu0 0.0
        %726 = vmatprep.subr.mxu0 0.0
        %727 = vmatpush1.msra.mxu0 0.0
        %728 = vmatprep.subr.mxu0 0.0
        %729 = vmatpush1.msra.mxu0 0.0
        %730 = vmatprep.subr.mxu0 0.0
        %731 = vmatpush1.msra.mxu0 0.0
        %732 = vmatprep.subr.mxu0 0.0
        %733 = vmatpush1.msra.mxu0 0.0
        %734 = vmatprep.mubr.f32.mxu0 0.0
        %735 = vmatmul.mubr.f32.gmra.mrb[0].mxu0 %v552
        %v736 = vpop.f32.mrb[0].mxu0
        %v737 = vadd.f32 %v668, %v736
        %v738 = vpop.f32.mrb[0].mxu0
        %739 = vdwg.mxu0
        %v740 = vld [vmem:[%s9] sm:$0xff]
        %v741 = vld [vmem:[%s9 + $0x8] sm:$0xff]
        %v742 = vld [vmem:[%s9 + $0x10] sm:$0xff]
        %v743 = vld [vmem:[%s9 + $0x18] sm:$0xff]
        %v744 = vld [vmem:[%s9 + $0x20] sm:$0xff]
        %v745 = vld [vmem:[%s9 + $0x28] sm:$0xff]
        %v746 = vld [vmem:[%s9 + $0x30] sm:$0xff]
        %v747 = vld [vmem:[%s9 + $0x38] sm:$0xff]
        %v748 = vld [vmem:[%s9 + $0x40] sm:$0xff]
        %v749 = vld [vmem:[%s9 + $0x48] sm:$0xff]
        %v750 = vld [vmem:[%s9 + $0x50] sm:$0xff]
        %v751 = vld [vmem:[%s9 + $0x58] sm:$0xff]
        %v752 = vld [vmem:[%s9 + $0x60] sm:$0xff]
        %v753 = vld [vmem:[%s9 + $0x68] sm:$0xff]
        %v754 = vld [vmem:[%s9 + $0x70] sm:$0xff]
        %v755 = vld [vmem:[%s9 + $0x78] sm:$0xff]
        %v756 = vld [vmem:[%s10] sm:$0x1]
        %v758 = vlaneseq
        %v759 = vshrl.u32 %v758, 7
        %v760 = vsub.s32 0, %v759
        %v761 = vrot.slane %v756, %v760
        %763 = vmatprep.subr.mxu0 0.0
        %764 = vmatpush1.msra.mxu0 %v740
        %765 = vmatprep.subr.mxu0 0.0
        %766 = vmatpush1.msra.mxu0 %v741
        %767 = vmatprep.subr.mxu0 0.0
        %768 = vmatpush1.msra.mxu0 %v742
        %769 = vmatprep.subr.mxu0 0.0
        %770 = vmatpush1.msra.mxu0 %v743
        %771 = vmatprep.subr.mxu0 0.0
        %772 = vmatpush1.msra.mxu0 %v744
        %773 = vmatprep.subr.mxu0 0.0
        %774 = vmatpush1.msra.mxu0 %v745
        %775 = vmatprep.subr.mxu0 0.0
        %776 = vmatpush1.msra.mxu0 %v746
        %777 = vmatprep.subr.mxu0 0.0
        %778 = vmatpush1.msra.mxu0 %v747
        %779 = vmatprep.subr.mxu0 0.0
        %780 = vmatpush1.msra.mxu0 %v748
        %781 = vmatprep.subr.mxu0 0.0
        %782 = vmatpush1.msra.mxu0 %v749
        %783 = vmatprep.subr.mxu0 0.0
        %784 = vmatpush1.msra.mxu0 %v750
        %785 = vmatprep.subr.mxu0 0.0
        %786 = vmatpush1.msra.mxu0 %v751
        %787 = vmatprep.subr.mxu0 0.0
        %788 = vmatpush1.msra.mxu0 %v752
        %789 = vmatprep.subr.mxu0 0.0
        %790 = vmatpush1.msra.mxu0 %v753
        %791 = vmatprep.subr.mxu0 0.0
        %792 = vmatpush1.msra.mxu0 %v754
        %793 = vmatprep.subr.mxu0 0.0
        %794 = vmatpush1.msra.mxu0 %v755
        %795 = vmatprep.subr.mxu0 0.0
        %796 = vmatpush1.msra.mxu0 0.0
        %797 = vmatprep.subr.mxu0 0.0
        %798 = vmatpush1.msra.mxu0 0.0
        %799 = vmatprep.subr.mxu0 0.0
        %800 = vmatpush1.msra.mxu0 0.0
        %801 = vmatprep.subr.mxu0 0.0
        %802 = vmatpush1.msra.mxu0 0.0
        %803 = vmatprep.subr.mxu0 0.0
        %804 = vmatpush1.msra.mxu0 0.0
        %805 = vmatprep.subr.mxu0 0.0
        %806 = vmatpush1.msra.mxu0 0.0
        %807 = vmatprep.subr.mxu0 0.0
        %808 = vmatpush1.msra.mxu0 0.0
        %809 = vmatprep.subr.mxu0 0.0
        %810 = vmatpush1.msra.mxu0 0.0
        %811 = vmatprep.subr.mxu0 0.0
        %812 = vmatpush1.msra.mxu0 0.0
        %813 = vmatprep.subr.mxu0 0.0
        %814 = vmatpush1.msra.mxu0 0.0
        %815 = vmatprep.subr.mxu0 0.0
        %816 = vmatpush1.msra.mxu0 0.0
        %817 = vmatprep.subr.mxu0 0.0
        %818 = vmatpush1.msra.mxu0 0.0
        %819 = vmatprep.subr.mxu0 0.0
        %820 = vmatpush1.msra.mxu0 0.0
        %821 = vmatprep.subr.mxu0 0.0
        %822 = vmatpush1.msra.mxu0 0.0
        %823 = vmatprep.subr.mxu0 0.0
        %824 = vmatpush1.msra.mxu0 0.0
        %825 = vmatprep.subr.mxu0 0.0
        %826 = vmatpush1.msra.mxu0 0.0
        %827 = vmatprep.mubr.f32.mxu0 0.0
        %828 = vmatmul.mubr.f32.gmra.mrb[0].mxu0 %v553
        %v829 = vpop.f32.mrb[0].mxu0
        %v830 = vadd.f32 %v761, %v829
        %v831 = vpop.f32.mrb[0].mxu0
        %832 = vdwg.mxu0
        %834 = vrot.lane.b32.xlu0 %v644, 120
        %v835 = vpop.permute.xlu0 %834
        %836 = vrot.lane.b32.xlu0 %v644, 112
        %v837 = vpop.permute.xlu0 %836
        %838 = vrot.lane.b32.xlu0 %v644, 104
        %v839 = vpop.permute.xlu0 %838
        %841 = vrot.lane.b32.xlu0 %v737, 120
        %v842 = vpop.permute.xlu0 %841
        %843 = vrot.lane.b32.xlu0 %v737, 112
        %v844 = vpop.permute.xlu0 %843
        %845 = vrot.lane.b32.xlu0 %v737, 104
        %v846 = vpop.permute.xlu0 %845
        %848 = vrot.lane.b32.xlu0 %v830, 120
        %v849 = vpop.permute.xlu0 %848
        %851 = vrot.lane.b32.xlu0 %v830, 112
        %v852 = vpop.permute.xlu0 %851
        %854 = vrot.lane.b32.xlu0 %v830, 104
        %v855 = vpop.permute.xlu0 %854
        %v857 = vld [vmem:[%s3] sm:$0xff]
        %v858 = vld [vmem:[%s3 + $0x8] sm:$0x3]
        %v859 = vld [vmem:[%s3 + $0x10] sm:$0xff]
        %v860 = vld [vmem:[%s3 + $0x18] sm:$0x3]
        %v861 = vld [vmem:[%s3 + $0x20] sm:$0xff]
        %v862 = vld [vmem:[%s3 + $0x28] sm:$0x3]
        %v863 = vld [vmem:[%s3 + $0x30] sm:$0xff]
        %v864 = vld [vmem:[%s3 + $0x38] sm:$0x3]
        %v865 = vld [vmem:[%s4] sm:$0xff]
        %v866 = vld [vmem:[%s4 + $0x8] sm:$0x3]
        %v867 = vld [vmem:[%s4 + $0x10] sm:$0xff]
        %v868 = vld [vmem:[%s4 + $0x18] sm:$0x3]
        %v869 = vld [vmem:[%s4 + $0x20] sm:$0xff]
        %v870 = vld [vmem:[%s4 + $0x28] sm:$0x3]
        %v871 = vld [vmem:[%s4 + $0x30] sm:$0xff]
        %v872 = vld [vmem:[%s4 + $0x38] sm:$0x3]
        %vm873 = vcmask 64512
        %v874 = vsel %vm873, %v644, 0
        %v876 = vsel %vm873, %v737, 0
        %878 = vmatprep.subr.mxu0 0.0
        %879 = vmatpush1.xpose.msra.mxu0 %v876
        %880 = vmatprep.subr.mxu0 0.0
        %881 = vmatpush1.xpose.msra.mxu0 0.0
        %882 = vmatprep.subr.mxu0 0.0
        %883 = vmatpush1.xpose.msra.mxu0 0.0
        %884 = vmatprep.subr.mxu0 0.0
        %885 = vmatpush1.xpose.msra.mxu0 0.0
        %886 = vmatprep.subr.mxu0 0.0
        %887 = vmatpush1.xpose.msra.mxu0 0.0
        %888 = vmatprep.subr.mxu0 0.0
        %889 = vmatpush1.xpose.msra.mxu0 0.0
        %890 = vmatprep.subr.mxu0 0.0
        %891 = vmatpush1.xpose.msra.mxu0 0.0
        %892 = vmatprep.subr.mxu0 0.0
        %893 = vmatpush1.xpose.msra.mxu0 0.0
        %894 = vmatprep.subr.mxu0 0.0
        %895 = vmatpush1.xpose.msra.mxu0 0.0
        %896 = vmatprep.subr.mxu0 0.0
        %897 = vmatpush1.xpose.msra.mxu0 0.0
        %898 = vmatprep.subr.mxu0 0.0
        %899 = vmatpush1.xpose.msra.mxu0 0.0
        %900 = vmatprep.subr.mxu0 0.0
        %901 = vmatpush1.xpose.msra.mxu0 0.0
        %902 = vmatprep.subr.mxu0 0.0
        %903 = vmatpush1.xpose.msra.mxu0 0.0
        %904 = vmatprep.subr.mxu0 0.0
        %905 = vmatpush1.xpose.msra.mxu0 0.0
        %906 = vmatprep.subr.mxu0 0.0
        %907 = vmatpush1.xpose.msra.mxu0 0.0
        %908 = vmatprep.subr.mxu0 0.0
        %909 = vmatpush1.xpose.msra.mxu0 0.0
        %910 = vmatprep.subr.mxu0 0.0
        %911 = vmatpush1.xpose.msra.mxu0 0.0
        %912 = vmatprep.subr.mxu0 0.0
        %913 = vmatpush1.xpose.msra.mxu0 0.0
        %914 = vmatprep.subr.mxu0 0.0
        %915 = vmatpush1.xpose.msra.mxu0 0.0
        %916 = vmatprep.subr.mxu0 0.0
        %917 = vmatpush1.xpose.msra.mxu0 0.0
        %918 = vmatprep.subr.mxu0 0.0
        %919 = vmatpush1.xpose.msra.mxu0 0.0
        %920 = vmatprep.subr.mxu0 0.0
        %921 = vmatpush1.xpose.msra.mxu0 0.0
        %922 = vmatprep.subr.mxu0 0.0
        %923 = vmatpush1.xpose.msra.mxu0 0.0
        %924 = vmatprep.subr.mxu0 0.0
        %925 = vmatpush1.xpose.msra.mxu0 0.0
        %926 = vmatprep.subr.mxu0 0.0
        %927 = vmatpush1.xpose.msra.mxu0 0.0
        %928 = vmatprep.subr.mxu0 0.0
        %929 = vmatpush1.xpose.msra.mxu0 0.0
        %930 = vmatprep.subr.mxu0 0.0
        %931 = vmatpush1.xpose.msra.mxu0 0.0
        %932 = vmatprep.subr.mxu0 0.0
        %933 = vmatpush1.xpose.msra.mxu0 0.0
        %934 = vmatprep.subr.mxu0 0.0
        %935 = vmatpush1.xpose.msra.mxu0 0.0
        %936 = vmatprep.subr.mxu0 0.0
        %937 = vmatpush1.xpose.msra.mxu0 0.0
        %938 = vmatprep.subr.mxu0 0.0
        %939 = vmatpush1.xpose.msra.mxu0 0.0
        %940 = vmatprep.subr.mxu0 0.0
        %941 = vmatpush1.xpose.msra.mxu0 0.0
        %942 = vmatprep.mubr.f32.mxu0 0.0
        %943 = vmatmul.mubr.f32.gmra.mrb[0].mxu0 %v874
        %v944 = vpop.f32.mrb[0].mxu0
        %v945 = vadd.f32 0.0, %v944
        %v946 = vpop.f32.mrb[0].mxu0
        %947 = vdwg.mxu0
        %v948 = vsel %vm873, %v835, 0
        %v950 = vsel %vm873, %v842, 0
        %952 = vmatprep.subr.mxu0 0.0
        %953 = vmatpush1.xpose.msra.mxu0 %v950
        %954 = vmatprep.subr.mxu0 0.0
        %955 = vmatpush1.xpose.msra.mxu0 0.0
        %956 = vmatprep.subr.mxu0 0.0
        %957 = vmatpush1.xpose.msra.mxu0 0.0
        %958 = vmatprep.subr.mxu0 0.0
        %959 = vmatpush1.xpose.msra.mxu0 0.0
        %960 = vmatprep.subr.mxu0 0.0
        %961 = vmatpush1.xpose.msra.mxu0 0.0
        %962 = vmatprep.subr.mxu0 0.0
        %963 = vmatpush1.xpose.msra.mxu0 0.0
        %964 = vmatprep.subr.mxu0 0.0
        %965 = vmatpush1.xpose.msra.mxu0 0.0
        %966 = vmatprep.subr.mxu0 0.0
        %967 = vmatpush1.xpose.msra.mxu0 0.0
        %968 = vmatprep.subr.mxu0 0.0
        %969 = vmatpush1.xpose.msra.mxu0 0.0
        %970 = vmatprep.subr.mxu0 0.0
        %971 = vmatpush1.xpose.msra.mxu0 0.0
        %972 = vmatprep.subr.mxu0 0.0
        %973 = vmatpush1.xpose.msra.mxu0 0.0
        %974 = vmatprep.subr.mxu0 0.0
        %975 = vmatpush1.xpose.msra.mxu0 0.0
        %976 = vmatprep.subr.mxu0 0.0
        %977 = vmatpush1.xpose.msra.mxu0 0.0
        %978 = vmatprep.subr.mxu0 0.0
        %979 = vmatpush1.xpose.msra.mxu0 0.0
        %980 = vmatprep.subr.mxu0 0.0
        %981 = vmatpush1.xpose.msra.mxu0 0.0
        %982 = vmatprep.subr.mxu0 0.0
        %983 = vmatpush1.xpose.msra.mxu0 0.0
        %984 = vmatprep.subr.mxu0 0.0
        %985 = vmatpush1.xpose.msra.mxu0 0.0
        %986 = vmatprep.subr.mxu0 0.0
        %987 = vmatpush1.xpose.msra.mxu0 0.0
        %988 = vmatprep.subr.mxu0 0.0
        %989 = vmatpush1.xpose.msra.mxu0 0.0
        %990 = vmatprep.subr.mxu0 0.0
        %991 = vmatpush1.xpose.msra.mxu0 0.0
        %992 = vmatprep.subr.mxu0 0.0
        %993 = vmatpush1.xpose.msra.mxu0 0.0
        %994 = vmatprep.subr.mxu0 0.0
        %995 = vmatpush1.xpose.msra.mxu0 0.0
        %996 = vmatprep.subr.mxu0 0.0
        %997 = vmatpush1.xpose.msra.mxu0 0.0
        %998 = vmatprep.subr.mxu0 0.0
        %999 = vmatpush1.xpose.msra.mxu0 0.0
        %1000 = vmatprep.subr.mxu0 0.0
        %1001 = vmatpush1.xpose.msra.mxu0 0.0
        %1002 = vmatprep.subr.mxu0 0.0
        %1003 = vmatpush1.xpose.msra.mxu0 0.0
        %1004 = vmatprep.subr.mxu0 0.0
        %1005 = vmatpush1.xpose.msra.mxu0 0.0
        %1006 = vmatprep.subr.mxu0 0.0
        %1007 = vmatpush1.xpose.msra.mxu0 0.0
        %1008 = vmatprep.subr.mxu0 0.0
        %1009 = vmatpush1.xpose.msra.mxu0 0.0
        %1010 = vmatprep.subr.mxu0 0.0
        %1011 = vmatpush1.xpose.msra.mxu0 0.0
        %1012 = vmatprep.subr.mxu0 0.0
        %1013 = vmatpush1.xpose.msra.mxu0 0.0
        %1014 = vmatprep.subr.mxu0 0.0
        %1015 = vmatpush1.xpose.msra.mxu0 0.0
        %1016 = vmatprep.mubr.f32.mxu0 0.0
        %1017 = vmatmul.mubr.f32.gmra.mrb[0].mxu0 %v948
        %v1018 = vpop.f32.mrb[0].mxu0
        %v1019 = vadd.f32 0.0, %v1018
        %v1020 = vpop.f32.mrb[0].mxu0
        %1021 = vdwg.mxu0
        %v1022 = vsel %vm873, %v837, 0
        %v1024 = vsel %vm873, %v844, 0
        %1026 = vmatprep.subr.mxu0 0.0
        %1027 = vmatpush1.xpose.msra.mxu0 %v1024
        %1028 = vmatprep.subr.mxu0 0.0
        %1029 = vmatpush1.xpose.msra.mxu0 0.0
        %1030 = vmatprep.subr.mxu0 0.0
        %1031 = vmatpush1.xpose.msra.mxu0 0.0
        %1032 = vmatprep.subr.mxu0 0.0
        %1033 = vmatpush1.xpose.msra.mxu0 0.0
        %1034 = vmatprep.subr.mxu0 0.0
        %1035 = vmatpush1.xpose.msra.mxu0 0.0
        %1036 = vmatprep.subr.mxu0 0.0
        %1037 = vmatpush1.xpose.msra.mxu0 0.0
        %1038 = vmatprep.subr.mxu0 0.0
        %1039 = vmatpush1.xpose.msra.mxu0 0.0
        %1040 = vmatprep.subr.mxu0 0.0
        %1041 = vmatpush1.xpose.msra.mxu0 0.0
        %1042 = vmatprep.subr.mxu0 0.0
        %1043 = vmatpush1.xpose.msra.mxu0 0.0
        %1044 = vmatprep.subr.mxu0 0.0
        %1045 = vmatpush1.xpose.msra.mxu0 0.0
        %1046 = vmatprep.subr.mxu0 0.0
        %1047 = vmatpush1.xpose.msra.mxu0 0.0
        %1048 = vmatprep.subr.mxu0 0.0
        %1049 = vmatpush1.xpose.msra.mxu0 0.0
        %1050 = vmatprep.subr.mxu0 0.0
        %1051 = vmatpush1.xpose.msra.mxu0 0.0
        %1052 = vmatprep.subr.mxu0 0.0
        %1053 = vmatpush1.xpose.msra.mxu0 0.0
        %1054 = vmatprep.subr.mxu0 0.0
        %1055 = vmatpush1.xpose.msra.mxu0 0.0
        %1056 = vmatprep.subr.mxu0 0.0
        %1057 = vmatpush1.xpose.msra.mxu0 0.0
        %1058 = vmatprep.subr.mxu0 0.0
        %1059 = vmatpush1.xpose.msra.mxu0 0.0
        %1060 = vmatprep.subr.mxu0 0.0
        %1061 = vmatpush1.xpose.msra.mxu0 0.0
        %1062 = vmatprep.subr.mxu0 0.0
        %1063 = vmatpush1.xpose.msra.mxu0 0.0
        %1064 = vmatprep.subr.mxu0 0.0
        %1065 = vmatpush1.xpose.msra.mxu0 0.0
        %1066 = vmatprep.subr.mxu0 0.0
        %1067 = vmatpush1.xpose.msra.mxu0 0.0
        %1068 = vmatprep.subr.mxu0 0.0
        %1069 = vmatpush1.xpose.msra.mxu0 0.0
        %1070 = vmatprep.subr.mxu0 0.0
        %1071 = vmatpush1.xpose.msra.mxu0 0.0
        %1072 = vmatprep.subr.mxu0 0.0
        %1073 = vmatpush1.xpose.msra.mxu0 0.0
        %1074 = vmatprep.subr.mxu0 0.0
        %1075 = vmatpush1.xpose.msra.mxu0 0.0
        %1076 = vmatprep.subr.mxu0 0.0
        %1077 = vmatpush1.xpose.msra.mxu0 0.0
        %1078 = vmatprep.subr.mxu0 0.0
        %1079 = vmatpush1.xpose.msra.mxu0 0.0
        %1080 = vmatprep.subr.mxu0 0.0
        %1081 = vmatpush1.xpose.msra.mxu0 0.0
        %1082 = vmatprep.subr.mxu0 0.0
        %1083 = vmatpush1.xpose.msra.mxu0 0.0
        %1084 = vmatprep.subr.mxu0 0.0
        %1085 = vmatpush1.xpose.msra.mxu0 0.0
        %1086 = vmatprep.subr.mxu0 0.0
        %1087 = vmatpush1.xpose.msra.mxu0 0.0
        %1088 = vmatprep.subr.mxu0 0.0
        %1089 = vmatpush1.xpose.msra.mxu0 0.0
        %1090 = vmatprep.mubr.f32.mxu0 0.0
        %1091 = vmatmul.mubr.f32.gmra.mrb[0].mxu0 %v1022
        %v1092 = vpop.f32.mrb[0].mxu0
        %v1093 = vadd.f32 0.0, %v1092
        %v1094 = vpop.f32.mrb[0].mxu0
        %1095 = vdwg.mxu0
        %v1096 = vsel %vm873, %v839, 0
        %v1098 = vsel %vm873, %v846, 0
        %1100 = vmatprep.subr.mxu0 0.0
        %1101 = vmatpush1.xpose.msra.mxu0 %v1098
        %1102 = vmatprep.subr.mxu0 0.0
        %1103 = vmatpush1.xpose.msra.mxu0 0.0
        %1104 = vmatprep.subr.mxu0 0.0
        %1105 = vmatpush1.xpose.msra.mxu0 0.0
        %1106 = vmatprep.subr.mxu0 0.0
        %1107 = vmatpush1.xpose.msra.mxu0 0.0
        %1108 = vmatprep.subr.mxu0 0.0
        %1109 = vmatpush1.xpose.msra.mxu0 0.0
        %1110 = vmatprep.subr.mxu0 0.0
        %1111 = vmatpush1.xpose.msra.mxu0 0.0
        %1112 = vmatprep.subr.mxu0 0.0
        %1113 = vmatpush1.xpose.msra.mxu0 0.0
        %1114 = vmatprep.subr.mxu0 0.0
        %1115 = vmatpush1.xpose.msra.mxu0 0.0
        %1116 = vmatprep.subr.mxu0 0.0
        %1117 = vmatpush1.xpose.msra.mxu0 0.0
        %1118 = vmatprep.subr.mxu0 0.0
        %1119 = vmatpush1.xpose.msra.mxu0 0.0
        %1120 = vmatprep.subr.mxu0 0.0
        %1121 = vmatpush1.xpose.msra.mxu0 0.0
        %1122 = vmatprep.subr.mxu0 0.0
        %1123 = vmatpush1.xpose.msra.mxu0 0.0
        %1124 = vmatprep.subr.mxu0 0.0
        %1125 = vmatpush1.xpose.msra.mxu0 0.0
        %1126 = vmatprep.subr.mxu0 0.0
        %1127 = vmatpush1.xpose.msra.mxu0 0.0
        %1128 = vmatprep.subr.mxu0 0.0
        %1129 = vmatpush1.xpose.msra.mxu0 0.0
        %1130 = vmatprep.subr.mxu0 0.0
        %1131 = vmatpush1.xpose.msra.mxu0 0.0
        %1132 = vmatprep.subr.mxu0 0.0
        %1133 = vmatpush1.xpose.msra.mxu0 0.0
        %1134 = vmatprep.subr.mxu0 0.0
        %1135 = vmatpush1.xpose.msra.mxu0 0.0
        %1136 = vmatprep.subr.mxu0 0.0
        %1137 = vmatpush1.xpose.msra.mxu0 0.0
        %1138 = vmatprep.subr.mxu0 0.0
        %1139 = vmatpush1.xpose.msra.mxu0 0.0
        %1140 = vmatprep.subr.mxu0 0.0
        %1141 = vmatpush1.xpose.msra.mxu0 0.0
        %1142 = vmatprep.subr.mxu0 0.0
        %1143 = vmatpush1.xpose.msra.mxu0 0.0
        %1144 = vmatprep.subr.mxu0 0.0
        %1145 = vmatpush1.xpose.msra.mxu0 0.0
        %1146 = vmatprep.subr.mxu0 0.0
        %1147 = vmatpush1.xpose.msra.mxu0 0.0
        %1148 = vmatprep.subr.mxu0 0.0
        %1149 = vmatpush1.xpose.msra.mxu0 0.0
        %1150 = vmatprep.subr.mxu0 0.0
        %1151 = vmatpush1.xpose.msra.mxu0 0.0
        %1152 = vmatprep.subr.mxu0 0.0
        %1153 = vmatpush1.xpose.msra.mxu0 0.0
        %1154 = vmatprep.subr.mxu0 0.0
        %1155 = vmatpush1.xpose.msra.mxu0 0.0
        %1156 = vmatprep.subr.mxu0 0.0
        %1157 = vmatpush1.xpose.msra.mxu0 0.0
        %1158 = vmatprep.subr.mxu0 0.0
        %1159 = vmatpush1.xpose.msra.mxu0 0.0
        %1160 = vmatprep.subr.mxu0 0.0
        %1161 = vmatpush1.xpose.msra.mxu0 0.0
        %1162 = vmatprep.subr.mxu0 0.0
        %1163 = vmatpush1.xpose.msra.mxu0 0.0
        %1164 = vmatprep.mubr.f32.mxu0 0.0
        %1165 = vmatmul.mubr.f32.gmra.mrb[0].mxu0 %v1096
        %v1166 = vpop.f32.mrb[0].mxu0
        %v1167 = vadd.f32 0.0, %v1166
        %v1168 = vpop.f32.mrb[0].mxu0
        %1169 = vdwg.mxu0
        %v1171 = vsel %vm873, %v857, 0
        %v1174 = vsel %vm873, %v858, 0
        %1176 = vmatprep.subr.mxu0 0.0
        %1177 = vmatpush1.xpose.msra.mxu0 %v1171
        %1178 = vmatprep.subr.mxu0 0.0
        %1179 = vmatpush1.xpose.msra.mxu0 %v1174
        %1180 = vmatprep.subr.mxu0 0.0
        %1181 = vmatpush1.xpose.msra.mxu0 0.0
        %1182 = vmatprep.subr.mxu0 0.0
        %1183 = vmatpush1.xpose.msra.mxu0 0.0
        %1184 = vmatprep.subr.mxu0 0.0
        %1185 = vmatpush1.xpose.msra.mxu0 0.0
        %1186 = vmatprep.subr.mxu0 0.0
        %1187 = vmatpush1.xpose.msra.mxu0 0.0
        %1188 = vmatprep.subr.mxu0 0.0
        %1189 = vmatpush1.xpose.msra.mxu0 0.0
        %1190 = vmatprep.subr.mxu0 0.0
        %1191 = vmatpush1.xpose.msra.mxu0 0.0
        %1192 = vmatprep.subr.mxu0 0.0
        %1193 = vmatpush1.xpose.msra.mxu0 0.0
        %1194 = vmatprep.subr.mxu0 0.0
        %1195 = vmatpush1.xpose.msra.mxu0 0.0
        %1196 = vmatprep.subr.mxu0 0.0
        %1197 = vmatpush1.xpose.msra.mxu0 0.0
        %1198 = vmatprep.subr.mxu0 0.0
        %1199 = vmatpush1.xpose.msra.mxu0 0.0
        %1200 = vmatprep.subr.mxu0 0.0
        %1201 = vmatpush1.xpose.msra.mxu0 0.0
        %1202 = vmatprep.subr.mxu0 0.0
        %1203 = vmatpush1.xpose.msra.mxu0 0.0
        %1204 = vmatprep.subr.mxu0 0.0
        %1205 = vmatpush1.xpose.msra.mxu0 0.0
        %1206 = vmatprep.subr.mxu0 0.0
        %1207 = vmatpush1.xpose.msra.mxu0 0.0
        %1208 = vmatprep.subr.mxu0 0.0
        %1209 = vmatpush1.xpose.msra.mxu0 0.0
        %1210 = vmatprep.subr.mxu0 0.0
        %1211 = vmatpush1.xpose.msra.mxu0 0.0
        %1212 = vmatprep.subr.mxu0 0.0
        %1213 = vmatpush1.xpose.msra.mxu0 0.0
        %1214 = vmatprep.subr.mxu0 0.0
        %1215 = vmatpush1.xpose.msra.mxu0 0.0
        %1216 = vmatprep.subr.mxu0 0.0
        %1217 = vmatpush1.xpose.msra.mxu0 0.0
        %1218 = vmatprep.subr.mxu0 0.0
        %1219 = vmatpush1.xpose.msra.mxu0 0.0
        %1220 = vmatprep.subr.mxu0 0.0
        %1221 = vmatpush1.xpose.msra.mxu0 0.0
        %1222 = vmatprep.subr.mxu0 0.0
        %1223 = vmatpush1.xpose.msra.mxu0 0.0
        %1224 = vmatprep.subr.mxu0 0.0
        %1225 = vmatpush1.xpose.msra.mxu0 0.0
        %1226 = vmatprep.subr.mxu0 0.0
        %1227 = vmatpush1.xpose.msra.mxu0 0.0
        %1228 = vmatprep.subr.mxu0 0.0
        %1229 = vmatpush1.xpose.msra.mxu0 0.0
        %1230 = vmatprep.subr.mxu0 0.0
        %1231 = vmatpush1.xpose.msra.mxu0 0.0
        %1232 = vmatprep.subr.mxu0 0.0
        %1233 = vmatpush1.xpose.msra.mxu0 0.0
        %1234 = vmatprep.subr.mxu0 0.0
        %1235 = vmatpush1.xpose.msra.mxu0 0.0
        %1236 = vmatprep.subr.mxu0 0.0
        %1237 = vmatpush1.xpose.msra.mxu0 0.0
        %1238 = vmatprep.subr.mxu0 0.0
        %1239 = vmatpush1.xpose.msra.mxu0 0.0
        %1240 = vmatprep.mubr.f32.mxu0 0.0
        %1241 = vmatmul.mubr.f32.gmra.mrb[0].mxu0 %v874
        %v1242 = vpop.f32.mrb[0].mxu0
        %v1243 = vadd.f32 0.0, %v1242
        %v1244 = vpop.f32.mrb[0].mxu0
        %1245 = vdwg.mxu0
        %v1247 = vsel %vm873, %v859, 0
        %v1250 = vsel %vm873, %v860, 0
        %1252 = vmatprep.subr.mxu0 0.0
        %1253 = vmatpush1.xpose.msra.mxu0 %v1247
        %1254 = vmatprep.subr.mxu0 0.0
        %1255 = vmatpush1.xpose.msra.mxu0 %v1250
        %1256 = vmatprep.subr.mxu0 0.0
        %1257 = vmatpush1.xpose.msra.mxu0 0.0
        %1258 = vmatprep.subr.mxu0 0.0
        %1259 = vmatpush1.xpose.msra.mxu0 0.0
        %1260 = vmatprep.subr.mxu0 0.0
        %1261 = vmatpush1.xpose.msra.mxu0 0.0
        %1262 = vmatprep.subr.mxu0 0.0
        %1263 = vmatpush1.xpose.msra.mxu0 0.0
        %1264 = vmatprep.subr.mxu0 0.0
        %1265 = vmatpush1.xpose.msra.mxu0 0.0
        %1266 = vmatprep.subr.mxu0 0.0
        %1267 = vmatpush1.xpose.msra.mxu0 0.0
        %1268 = vmatprep.subr.mxu0 0.0
        %1269 = vmatpush1.xpose.msra.mxu0 0.0
        %1270 = vmatprep.subr.mxu0 0.0
        %1271 = vmatpush1.xpose.msra.mxu0 0.0
        %1272 = vmatprep.subr.mxu0 0.0
        %1273 = vmatpush1.xpose.msra.mxu0 0.0
        %1274 = vmatprep.subr.mxu0 0.0
        %1275 = vmatpush1.xpose.msra.mxu0 0.0
        %1276 = vmatprep.subr.mxu0 0.0
        %1277 = vmatpush1.xpose.msra.mxu0 0.0
        %1278 = vmatprep.subr.mxu0 0.0
        %1279 = vmatpush1.xpose.msra.mxu0 0.0
        %1280 = vmatprep.subr.mxu0 0.0
        %1281 = vmatpush1.xpose.msra.mxu0 0.0
        %1282 = vmatprep.subr.mxu0 0.0
        %1283 = vmatpush1.xpose.msra.mxu0 0.0
        %1284 = vmatprep.subr.mxu0 0.0
        %1285 = vmatpush1.xpose.msra.mxu0 0.0
        %1286 = vmatprep.subr.mxu0 0.0
        %1287 = vmatpush1.xpose.msra.mxu0 0.0
        %1288 = vmatprep.subr.mxu0 0.0
        %1289 = vmatpush1.xpose.msra.mxu0 0.0
        %1290 = vmatprep.subr.mxu0 0.0
        %1291 = vmatpush1.xpose.msra.mxu0 0.0
        %1292 = vmatprep.subr.mxu0 0.0
        %1293 = vmatpush1.xpose.msra.mxu0 0.0
        %1294 = vmatprep.subr.mxu0 0.0
        %1295 = vmatpush1.xpose.msra.mxu0 0.0
        %1296 = vmatprep.subr.mxu0 0.0
        %1297 = vmatpush1.xpose.msra.mxu0 0.0
        %1298 = vmatprep.subr.mxu0 0.0
        %1299 = vmatpush1.xpose.msra.mxu0 0.0
        %1300 = vmatprep.subr.mxu0 0.0
        %1301 = vmatpush1.xpose.msra.mxu0 0.0
        %1302 = vmatprep.subr.mxu0 0.0
        %1303 = vmatpush1.xpose.msra.mxu0 0.0
        %1304 = vmatprep.subr.mxu0 0.0
        %1305 = vmatpush1.xpose.msra.mxu0 0.0
        %1306 = vmatprep.subr.mxu0 0.0
        %1307 = vmatpush1.xpose.msra.mxu0 0.0
        %1308 = vmatprep.subr.mxu0 0.0
        %1309 = vmatpush1.xpose.msra.mxu0 0.0
        %1310 = vmatprep.subr.mxu0 0.0
        %1311 = vmatpush1.xpose.msra.mxu0 0.0
        %1312 = vmatprep.subr.mxu0 0.0
        %1313 = vmatpush1.xpose.msra.mxu0 0.0
        %1314 = vmatprep.subr.mxu0 0.0
        %1315 = vmatpush1.xpose.msra.mxu0 0.0
        %1316 = vmatprep.mubr.f32.mxu0 0.0
        %1317 = vmatmul.mubr.f32.gmra.mrb[0].mxu0 %v948
        %v1318 = vpop.f32.mrb[0].mxu0
        %v1319 = vadd.f32 0.0, %v1318
        %v1320 = vpop.f32.mrb[0].mxu0
        %1321 = vdwg.mxu0
        %v1323 = vsel %vm873, %v861, 0
        %v1326 = vsel %vm873, %v862, 0
        %1328 = vmatprep.subr.mxu0 0.0
        %1329 = vmatpush1.xpose.msra.mxu0 %v1323
        %1330 = vmatprep.subr.mxu0 0.0
        %1331 = vmatpush1.xpose.msra.mxu0 %v1326
        %1332 = vmatprep.subr.mxu0 0.0
        %1333 = vmatpush1.xpose.msra.mxu0 0.0
        %1334 = vmatprep.subr.mxu0 0.0
        %1335 = vmatpush1.xpose.msra.mxu0 0.0
        %1336 = vmatprep.subr.mxu0 0.0
        %1337 = vmatpush1.xpose.msra.mxu0 0.0
        %1338 = vmatprep.subr.mxu0 0.0
        %1339 = vmatpush1.xpose.msra.mxu0 0.0
        %1340 = vmatprep.subr.mxu0 0.0
        %1341 = vmatpush1.xpose.msra.mxu0 0.0
        %1342 = vmatprep.subr.mxu0 0.0
        %1343 = vmatpush1.xpose.msra.mxu0 0.0
        %1344 = vmatprep.subr.mxu0 0.0
        %1345 = vmatpush1.xpose.msra.mxu0 0.0
        %1346 = vmatprep.subr.mxu0 0.0
        %1347 = vmatpush1.xpose.msra.mxu0 0.0
        %1348 = vmatprep.subr.mxu0 0.0
        %1349 = vmatpush1.xpose.msra.mxu0 0.0
        %1350 = vmatprep.subr.mxu0 0.0
        %1351 = vmatpush1.xpose.msra.mxu0 0.0
        %1352 = vmatprep.subr.mxu0 0.0
        %1353 = vmatpush1.xpose.msra.mxu0 0.0
        %1354 = vmatprep.subr.mxu0 0.0
        %1355 = vmatpush1.xpose.msra.mxu0 0.0
        %1356 = vmatprep.subr.mxu0 0.0
        %1357 = vmatpush1.xpose.msra.mxu0 0.0
        %1358 = vmatprep.subr.mxu0 0.0
        %1359 = vmatpush1.xpose.msra.mxu0 0.0
        %1360 = vmatprep.subr.mxu0 0.0
        %1361 = vmatpush1.xpose.msra.mxu0 0.0
        %1362 = vmatprep.subr.mxu0 0.0
        %1363 = vmatpush1.xpose.msra.mxu0 0.0
        %1364 = vmatprep.subr.mxu0 0.0
        %1365 = vmatpush1.xpose.msra.mxu0 0.0
        %1366 = vmatprep.subr.mxu0 0.0
        %1367 = vmatpush1.xpose.msra.mxu0 0.0
        %1368 = vmatprep.subr.mxu0 0.0
        %1369 = vmatpush1.xpose.msra.mxu0 0.0
        %1370 = vmatprep.subr.mxu0 0.0
        %1371 = vmatpush1.xpose.msra.mxu0 0.0
        %1372 = vmatprep.subr.mxu0 0.0
        %1373 = vmatpush1.xpose.msra.mxu0 0.0
        %1374 = vmatprep.subr.mxu0 0.0
        %1375 = vmatpush1.xpose.msra.mxu0 0.0
        %1376 = vmatprep.subr.mxu0 0.0
        %1377 = vmatpush1.xpose.msra.mxu0 0.0
        %1378 = vmatprep.subr.mxu0 0.0
        %1379 = vmatpush1.xpose.msra.mxu0 0.0
        %1380 = vmatprep.subr.mxu0 0.0
        %1381 = vmatpush1.xpose.msra.mxu0 0.0
        %1382 = vmatprep.subr.mxu0 0.0
        %1383 = vmatpush1.xpose.msra.mxu0 0.0
        %1384 = vmatprep.subr.mxu0 0.0
        %1385 = vmatpush1.xpose.msra.mxu0 0.0
        %1386 = vmatprep.subr.mxu0 0.0
        %1387 = vmatpush1.xpose.msra.mxu0 0.0
        %1388 = vmatprep.subr.mxu0 0.0
        %1389 = vmatpush1.xpose.msra.mxu0 0.0
        %1390 = vmatprep.subr.mxu0 0.0
        %1391 = vmatpush1.xpose.msra.mxu0 0.0
        %1392 = vmatprep.mubr.f32.mxu0 0.0
        %1393 = vmatmul.mubr.f32.gmra.mrb[0].mxu0 %v1022
        %v1394 = vpop.f32.mrb[0].mxu0
        %v1395 = vadd.f32 0.0, %v1394
        %v1396 = vpop.f32.mrb[0].mxu0
        %1397 = vdwg.mxu0
        %v1399 = vsel %vm873, %v863, 0
        %v1402 = vsel %vm873, %v864, 0
        %1404 = vmatprep.subr.mxu0 0.0
        %1405 = vmatpush1.xpose.msra.mxu0 %v1399
        %1406 = vmatprep.subr.mxu0 0.0
        %1407 = vmatpush1.xpose.msra.mxu0 %v1402
        %1408 = vmatprep.subr.mxu0 0.0
        %1409 = vmatpush1.xpose.msra.mxu0 0.0
        %1410 = vmatprep.subr.mxu0 0.0
        %1411 = vmatpush1.xpose.msra.mxu0 0.0
        %1412 = vmatprep.subr.mxu0 0.0
        %1413 = vmatpush1.xpose.msra.mxu0 0.0
        %1414 = vmatprep.subr.mxu0 0.0
        %1415 = vmatpush1.xpose.msra.mxu0 0.0
        %1416 = vmatprep.subr.mxu0 0.0
        %1417 = vmatpush1.xpose.msra.mxu0 0.0
        %1418 = vmatprep.subr.mxu0 0.0
        %1419 = vmatpush1.xpose.msra.mxu0 0.0
        %1420 = vmatprep.subr.mxu0 0.0
        %1421 = vmatpush1.xpose.msra.mxu0 0.0
        %1422 = vmatprep.subr.mxu0 0.0
        %1423 = vmatpush1.xpose.msra.mxu0 0.0
        %1424 = vmatprep.subr.mxu0 0.0
        %1425 = vmatpush1.xpose.msra.mxu0 0.0
        %1426 = vmatprep.subr.mxu0 0.0
        %1427 = vmatpush1.xpose.msra.mxu0 0.0
        %1428 = vmatprep.subr.mxu0 0.0
        %1429 = vmatpush1.xpose.msra.mxu0 0.0
        %1430 = vmatprep.subr.mxu0 0.0
        %1431 = vmatpush1.xpose.msra.mxu0 0.0
        %1432 = vmatprep.subr.mxu0 0.0
        %1433 = vmatpush1.xpose.msra.mxu0 0.0
        %1434 = vmatprep.subr.mxu0 0.0
        %1435 = vmatpush1.xpose.msra.mxu0 0.0
        %1436 = vmatprep.subr.mxu0 0.0
        %1437 = vmatpush1.xpose.msra.mxu0 0.0
        %1438 = vmatprep.subr.mxu0 0.0
        %1439 = vmatpush1.xpose.msra.mxu0 0.0
        %1440 = vmatprep.subr.mxu0 0.0
        %1441 = vmatpush1.xpose.msra.mxu0 0.0
        %1442 = vmatprep.subr.mxu0 0.0
        %1443 = vmatpush1.xpose.msra.mxu0 0.0
        %1444 = vmatprep.subr.mxu0 0.0
        %1445 = vmatpush1.xpose.msra.mxu0 0.0
        %1446 = vmatprep.subr.mxu0 0.0
        %1447 = vmatpush1.xpose.msra.mxu0 0.0
        %1448 = vmatprep.subr.mxu0 0.0
        %1449 = vmatpush1.xpose.msra.mxu0 0.0
        %1450 = vmatprep.subr.mxu0 0.0
        %1451 = vmatpush1.xpose.msra.mxu0 0.0
        %1452 = vmatprep.subr.mxu0 0.0
        %1453 = vmatpush1.xpose.msra.mxu0 0.0
        %1454 = vmatprep.subr.mxu0 0.0
        %1455 = vmatpush1.xpose.msra.mxu0 0.0
        %1456 = vmatprep.subr.mxu0 0.0
        %1457 = vmatpush1.xpose.msra.mxu0 0.0
        %1458 = vmatprep.subr.mxu0 0.0
        %1459 = vmatpush1.xpose.msra.mxu0 0.0
        %1460 = vmatprep.subr.mxu0 0.0
        %1461 = vmatpush1.xpose.msra.mxu0 0.0
        %1462 = vmatprep.subr.mxu0 0.0
        %1463 = vmatpush1.xpose.msra.mxu0 0.0
        %1464 = vmatprep.subr.mxu0 0.0
        %1465 = vmatpush1.xpose.msra.mxu0 0.0
        %1466 = vmatprep.subr.mxu0 0.0
        %1467 = vmatpush1.xpose.msra.mxu0 0.0
        %1468 = vmatprep.mubr.f32.mxu0 0.0
        %1469 = vmatmul.mubr.f32.gmra.mrb[0].mxu0 %v1096
        %v1470 = vpop.f32.mrb[0].mxu0
        %v1471 = vadd.f32 0.0, %v1470
        %v1472 = vpop.f32.mrb[0].mxu0
        %1473 = vdwg.mxu0
        %v1474 = vsel %vm873, %v945, -inf
        %1475 = vmax.xlane.f32.xlu0 %v1474
        %v1476 = vpop.xlane.xlu0 %1475
        %v1477 = vsel %vm873, %v1019, -inf
        %1478 = vmax.xlane.f32.xlu0 %v1477
        %v1479 = vpop.xlane.xlu0 %1478
        %v1480 = vsel %vm873, %v1093, -inf
        %1481 = vmax.xlane.f32.xlu0 %v1480
        %v1482 = vpop.xlane.xlu0 %1481
        %v1483 = vsel %vm873, %v1167, -inf
        %1484 = vmax.xlane.f32.xlu0 %v1483
        %v1485 = vpop.xlane.xlu0 %1484
        %vm1486 = vcmask 80896
        %v1487 = vsel %vm1486, %v1243, -inf
        %1488 = vmax.xlane.f32.xlu0 %v1487
        %v1489 = vpop.xlane.xlu0 %1488
        %v1490 = vsel %vm1486, %v1319, -inf
        %1491 = vmax.xlane.f32.xlu0 %v1490
        %v1492 = vpop.xlane.xlu0 %1491
        %v1493 = vsel %vm1486, %v1395, -inf
        %1494 = vmax.xlane.f32.xlu0 %v1493
        %v1495 = vpop.xlane.xlu0 %1494
        %v1496 = vsel %vm1486, %v1471, -inf
        %1497 = vmax.xlane.f32.xlu0 %v1496
        %v1498 = vpop.xlane.xlu0 %1497
        %v1499 = vmax.f32 %v1476, %v1489
        %v1500 = vmax.f32 %v1479, %v1492
        %v1501 = vmax.f32 %v1482, %v1495
        %v1502 = vmax.f32 %v1485, %v1498
        %v1503 = vsub.f32 %v945, %v1499
        %v1504 = vsub.f32 %v1019, %v1500
        %v1505 = vsub.f32 %v1093, %v1501
        %v1506 = vsub.f32 %v1167, %v1502
        %v1507 = vmul.f32 %v1503, 1.442695
        %v1508 = vpow.pop %v1507
        %v1509 = vmul.f32 %v1504, 1.442695
        %v1510 = vpow.pop %v1509
        %v1511 = vmul.f32 %v1505, 1.442695
        %v1512 = vpow.pop %v1511
        %v1513 = vmul.f32 %v1506, 1.442695
        %v1514 = vpow.pop %v1513
        %v1515 = vsub.f32 %v1243, %v1499
        %v1516 = vsub.f32 %v1319, %v1500
        %v1517 = vsub.f32 %v1395, %v1501
        %v1518 = vsub.f32 %v1471, %v1502
        %v1519 = vmul.f32 %v1515, 1.442695
        %v1520 = vpow.pop %v1519
        %v1521 = vmul.f32 %v1516, 1.442695
        %v1522 = vpow.pop %v1521
        %v1523 = vmul.f32 %v1517, 1.442695
        %v1524 = vpow.pop %v1523
        %v1525 = vmul.f32 %v1518, 1.442695
        %v1526 = vpow.pop %v1525
        %v1527 = vsel %vm873, %v1508, 0.0
        %1528 = vadd.xlane.f32.xlu0 %v1527
        %v1529 = vpop.xlane.xlu0 %1528
        %v1530 = vsel %vm873, %v1510, 0.0
        %1531 = vadd.xlane.f32.xlu0 %v1530
        %v1532 = vpop.xlane.xlu0 %1531
        %v1533 = vsel %vm873, %v1512, 0.0
        %1534 = vadd.xlane.f32.xlu0 %v1533
        %v1535 = vpop.xlane.xlu0 %1534
        %v1536 = vsel %vm873, %v1514, 0.0
        %1537 = vadd.xlane.f32.xlu0 %v1536
        %v1538 = vpop.xlane.xlu0 %1537
        %v1539 = vsel %vm1486, %v1520, 0.0
        %1540 = vadd.xlane.f32.xlu0 %v1539
        %v1541 = vpop.xlane.xlu0 %1540
        %v1542 = vsel %vm1486, %v1522, 0.0
        %1543 = vadd.xlane.f32.xlu0 %v1542
        %v1544 = vpop.xlane.xlu0 %1543
        %v1545 = vsel %vm1486, %v1524, 0.0
        %1546 = vadd.xlane.f32.xlu0 %v1545
        %v1547 = vpop.xlane.xlu0 %1546
        %v1548 = vsel %vm1486, %v1526, 0.0
        %1549 = vadd.xlane.f32.xlu0 %v1548
        %v1550 = vpop.xlane.xlu0 %1549
        %v1551 = vadd.f32 %v1529, %v1541
        %v1552 = vadd.f32 %v1532, %v1544
        %v1553 = vadd.f32 %v1535, %v1547
        %v1554 = vadd.f32 %v1538, %v1550
        %v1555 = vrcp.pop %v1551
        %v1556 = vrcp.pop %v1552
        %v1557 = vrcp.pop %v1553
        %v1558 = vrcp.pop %v1554
        %v1559 = vmul.f32 %v1551, %v1555
        %v1560 = vmul.f32 %v1552, %v1556
        %v1561 = vmul.f32 %v1553, %v1557
        %v1562 = vmul.f32 %v1554, %v1558
        %v1563 = vsub.f32 2.0, %v1559
        %v1564 = vsub.f32 2.0, %v1560
        %v1565 = vsub.f32 2.0, %v1561
        %v1566 = vsub.f32 2.0, %v1562
        %v1567 = vmul.f32 %v1555, %v1563
        %v1568 = vmul.f32 %v1556, %v1564
        %v1569 = vmul.f32 %v1557, %v1565
        %v1570 = vmul.f32 %v1558, %v1566
        %v1572 = vsel %vm1486, %v1520, 0
        %vm1574 = vcmask 1041408
        %v1576 = vsel %vm1574, %v866, 0
        %1578 = vmatprep.subr.mxu0 0.0
        %1579 = vmatpush1.msra.mxu0 %v865
        %1580 = vmatprep.subr.mxu0 0.0
        %1581 = vmatpush1.msra.mxu0 %v1576
        %1582 = vmatprep.subr.mxu0 0.0
        %1583 = vmatpush1.msra.mxu0 0.0
        %1584 = vmatprep.subr.mxu0 0.0
        %1585 = vmatpush1.msra.mxu0 0.0
        %1586 = vmatprep.subr.mxu0 0.0
        %1587 = vmatpush1.msra.mxu0 0.0
        %1588 = vmatprep.subr.mxu0 0.0
        %1589 = vmatpush1.msra.mxu0 0.0
        %1590 = vmatprep.subr.mxu0 0.0
        %1591 = vmatpush1.msra.mxu0 0.0
        %1592 = vmatprep.subr.mxu0 0.0
        %1593 = vmatpush1.msra.mxu0 0.0
        %1594 = vmatprep.subr.mxu0 0.0
        %1595 = vmatpush1.msra.mxu0 0.0
        %1596 = vmatprep.subr.mxu0 0.0
        %1597 = vmatpush1.msra.mxu0 0.0
        %1598 = vmatprep.subr.mxu0 0.0
        %1599 = vmatpush1.msra.mxu0 0.0
        %1600 = vmatprep.subr.mxu0 0.0
        %1601 = vmatpush1.msra.mxu0 0.0
        %1602 = vmatprep.subr.mxu0 0.0
        %1603 = vmatpush1.msra.mxu0 0.0
        %1604 = vmatprep.subr.mxu0 0.0
        %1605 = vmatpush1.msra.mxu0 0.0
        %1606 = vmatprep.subr.mxu0 0.0
        %1607 = vmatpush1.msra.mxu0 0.0
        %1608 = vmatprep.subr.mxu0 0.0
        %1609 = vmatpush1.msra.mxu0 0.0
        %1610 = vmatprep.subr.mxu0 0.0
        %1611 = vmatpush1.msra.mxu0 0.0
        %1612 = vmatprep.subr.mxu0 0.0
        %1613 = vmatpush1.msra.mxu0 0.0
        %1614 = vmatprep.subr.mxu0 0.0
        %1615 = vmatpush1.msra.mxu0 0.0
        %1616 = vmatprep.subr.mxu0 0.0
        %1617 = vmatpush1.msra.mxu0 0.0
        %1618 = vmatprep.subr.mxu0 0.0
        %1619 = vmatpush1.msra.mxu0 0.0
        %1620 = vmatprep.subr.mxu0 0.0
        %1621 = vmatpush1.msra.mxu0 0.0
        %1622 = vmatprep.subr.mxu0 0.0
        %1623 = vmatpush1.msra.mxu0 0.0
        %1624 = vmatprep.subr.mxu0 0.0
        %1625 = vmatpush1.msra.mxu0 0.0
        %1626 = vmatprep.subr.mxu0 0.0
        %1627 = vmatpush1.msra.mxu0 0.0
        %1628 = vmatprep.subr.mxu0 0.0
        %1629 = vmatpush1.msra.mxu0 0.0
        %1630 = vmatprep.subr.mxu0 0.0
        %1631 = vmatpush1.msra.mxu0 0.0
        %1632 = vmatprep.subr.mxu0 0.0
        %1633 = vmatpush1.msra.mxu0 0.0
        %1634 = vmatprep.subr.mxu0 0.0
        %1635 = vmatpush1.msra.mxu0 0.0
        %1636 = vmatprep.subr.mxu0 0.0
        %1637 = vmatpush1.msra.mxu0 0.0
        %1638 = vmatprep.subr.mxu0 0.0
        %1639 = vmatpush1.msra.mxu0 0.0
        %1640 = vmatprep.subr.mxu0 0.0
        %1641 = vmatpush1.msra.mxu0 0.0
        %1642 = vmatprep.mubr.f32.mxu0 0.0
        %1643 = vmatmul.mubr.f32.gmra.mrb[0].mxu0 %v1572
        %v1644 = vpop.f32.mrb[0].mxu0
        %v1645 = vadd.f32 0.0, %v1644
        %v1646 = vpop.f32.mrb[0].mxu0
        %1647 = vdwg.mxu0
        %v1649 = vsel %vm1486, %v1522, 0
        %v1652 = vsel %vm1574, %v868, 0
        %1654 = vmatprep.subr.mxu0 0.0
        %1655 = vmatpush1.msra.mxu0 %v867
        %1656 = vmatprep.subr.mxu0 0.0
        %1657 = vmatpush1.msra.mxu0 %v1652
        %1658 = vmatprep.subr.mxu0 0.0
        %1659 = vmatpush1.msra.mxu0 0.0
        %1660 = vmatprep.subr.mxu0 0.0
        %1661 = vmatpush1.msra.mxu0 0.0
        %1662 = vmatprep.subr.mxu0 0.0
        %1663 = vmatpush1.msra.mxu0 0.0
        %1664 = vmatprep.subr.mxu0 0.0
        %1665 = vmatpush1.msra.mxu0 0.0
        %1666 = vmatprep.subr.mxu0 0.0
        %1667 = vmatpush1.msra.mxu0 0.0
        %1668 = vmatprep.subr.mxu0 0.0
        %1669 = vmatpush1.msra.mxu0 0.0
        %1670 = vmatprep.subr.mxu0 0.0
        %1671 = vmatpush1.msra.mxu0 0.0
        %1672 = vmatprep.subr.mxu0 0.0
        %1673 = vmatpush1.msra.mxu0 0.0
        %1674 = vmatprep.subr.mxu0 0.0
        %1675 = vmatpush1.msra.mxu0 0.0
        %1676 = vmatprep.subr.mxu0 0.0
        %1677 = vmatpush1.msra.mxu0 0.0
        %1678 = vmatprep.subr.mxu0 0.0
        %1679 = vmatpush1.msra.mxu0 0.0
        %1680 = vmatprep.subr.mxu0 0.0
        %1681 = vmatpush1.msra.mxu0 0.0
        %1682 = vmatprep.subr.mxu0 0.0
        %1683 = vmatpush1.msra.mxu0 0.0
        %1684 = vmatprep.subr.mxu0 0.0
        %1685 = vmatpush1.msra.mxu0 0.0
        %1686 = vmatprep.subr.mxu0 0.0
        %1687 = vmatpush1.msra.mxu0 0.0
        %1688 = vmatprep.subr.mxu0 0.0
        %1689 = vmatpush1.msra.mxu0 0.0
        %1690 = vmatprep.subr.mxu0 0.0
        %1691 = vmatpush1.msra.mxu0 0.0
        %1692 = vmatprep.subr.mxu0 0.0
        %1693 = vmatpush1.msra.mxu0 0.0
        %1694 = vmatprep.subr.mxu0 0.0
        %1695 = vmatpush1.msra.mxu0 0.0
        %1696 = vmatprep.subr.mxu0 0.0
        %1697 = vmatpush1.msra.mxu0 0.0
        %1698 = vmatprep.subr.mxu0 0.0
        %1699 = vmatpush1.msra.mxu0 0.0
        %1700 = vmatprep.subr.mxu0 0.0
        %1701 = vmatpush1.msra.mxu0 0.0
        %1702 = vmatprep.subr.mxu0 0.0
        %1703 = vmatpush1.msra.mxu0 0.0
        %1704 = vmatprep.subr.mxu0 0.0
        %1705 = vmatpush1.msra.mxu0 0.0
        %1706 = vmatprep.subr.mxu0 0.0
        %1707 = vmatpush1.msra.mxu0 0.0
        %1708 = vmatprep.subr.mxu0 0.0
        %1709 = vmatpush1.msra.mxu0 0.0
        %1710 = vmatprep.subr.mxu0 0.0
        %1711 = vmatpush1.msra.mxu0 0.0
        %1712 = vmatprep.subr.mxu0 0.0
        %1713 = vmatpush1.msra.mxu0 0.0
        %1714 = vmatprep.subr.mxu0 0.0
        %1715 = vmatpush1.msra.mxu0 0.0
        %1716 = vmatprep.subr.mxu0 0.0
        %1717 = vmatpush1.msra.mxu0 0.0
        %1718 = vmatprep.mubr.f32.mxu0 0.0
        %1719 = vmatmul.mubr.f32.gmra.mrb[0].mxu0 %v1649
        %v1720 = vpop.f32.mrb[0].mxu0
        %v1721 = vadd.f32 0.0, %v1720
        %v1722 = vpop.f32.mrb[0].mxu0
        %1723 = vdwg.mxu0
        %v1725 = vsel %vm1486, %v1524, 0
        %v1728 = vsel %vm1574, %v870, 0
        %1730 = vmatprep.subr.mxu0 0.0
        %1731 = vmatpush1.msra.mxu0 %v869
        %1732 = vmatprep.subr.mxu0 0.0
        %1733 = vmatpush1.msra.mxu0 %v1728
        %1734 = vmatprep.subr.mxu0 0.0
        %1735 = vmatpush1.msra.mxu0 0.0
        %1736 = vmatprep.subr.mxu0 0.0
        %1737 = vmatpush1.msra.mxu0 0.0
        %1738 = vmatprep.subr.mxu0 0.0
        %1739 = vmatpush1.msra.mxu0 0.0
        %1740 = vmatprep.subr.mxu0 0.0
        %1741 = vmatpush1.msra.mxu0 0.0
        %1742 = vmatprep.subr.mxu0 0.0
        %1743 = vmatpush1.msra.mxu0 0.0
        %1744 = vmatprep.subr.mxu0 0.0
        %1745 = vmatpush1.msra.mxu0 0.0
        %1746 = vmatprep.subr.mxu0 0.0
        %1747 = vmatpush1.msra.mxu0 0.0
        %1748 = vmatprep.subr.mxu0 0.0
        %1749 = vmatpush1.msra.mxu0 0.0
        %1750 = vmatprep.subr.mxu0 0.0
        %1751 = vmatpush1.msra.mxu0 0.0
        %1752 = vmatprep.subr.mxu0 0.0
        %1753 = vmatpush1.msra.mxu0 0.0
        %1754 = vmatprep.subr.mxu0 0.0
        %1755 = vmatpush1.msra.mxu0 0.0
        %1756 = vmatprep.subr.mxu0 0.0
        %1757 = vmatpush1.msra.mxu0 0.0
        %1758 = vmatprep.subr.mxu0 0.0
        %1759 = vmatpush1.msra.mxu0 0.0
        %1760 = vmatprep.subr.mxu0 0.0
        %1761 = vmatpush1.msra.mxu0 0.0
        %1762 = vmatprep.subr.mxu0 0.0
        %1763 = vmatpush1.msra.mxu0 0.0
        %1764 = vmatprep.subr.mxu0 0.0
        %1765 = vmatpush1.msra.mxu0 0.0
        %1766 = vmatprep.subr.mxu0 0.0
        %1767 = vmatpush1.msra.mxu0 0.0
        %1768 = vmatprep.subr.mxu0 0.0
        %1769 = vmatpush1.msra.mxu0 0.0
        %1770 = vmatprep.subr.mxu0 0.0
        %1771 = vmatpush1.msra.mxu0 0.0
        %1772 = vmatprep.subr.mxu0 0.0
        %1773 = vmatpush1.msra.mxu0 0.0
        %1774 = vmatprep.subr.mxu0 0.0
        %1775 = vmatpush1.msra.mxu0 0.0
        %1776 = vmatprep.subr.mxu0 0.0
        %1777 = vmatpush1.msra.mxu0 0.0
        %1778 = vmatprep.subr.mxu0 0.0
        %1779 = vmatpush1.msra.mxu0 0.0
        %1780 = vmatprep.subr.mxu0 0.0
        %1781 = vmatpush1.msra.mxu0 0.0
        %1782 = vmatprep.subr.mxu0 0.0
        %1783 = vmatpush1.msra.mxu0 0.0
        %1784 = vmatprep.subr.mxu0 0.0
        %1785 = vmatpush1.msra.mxu0 0.0
        %1786 = vmatprep.subr.mxu0 0.0
        %1787 = vmatpush1.msra.mxu0 0.0
        %1788 = vmatprep.subr.mxu0 0.0
        %1789 = vmatpush1.msra.mxu0 0.0
        %1790 = vmatprep.subr.mxu0 0.0
        %1791 = vmatpush1.msra.mxu0 0.0
        %1792 = vmatprep.subr.mxu0 0.0
        %1793 = vmatpush1.msra.mxu0 0.0
        %1794 = vmatprep.mubr.f32.mxu0 0.0
        %1795 = vmatmul.mubr.f32.gmra.mrb[0].mxu0 %v1725
        %v1796 = vpop.f32.mrb[0].mxu0
        %v1797 = vadd.f32 0.0, %v1796
        %v1798 = vpop.f32.mrb[0].mxu0
        %1799 = vdwg.mxu0
        %v1801 = vsel %vm1486, %v1526, 0
        %v1804 = vsel %vm1574, %v872, 0
        %1806 = vmatprep.subr.mxu0 0.0
        %1807 = vmatpush1.msra.mxu0 %v871
        %1808 = vmatprep.subr.mxu0 0.0
        %1809 = vmatpush1.msra.mxu0 %v1804
        %1810 = vmatprep.subr.mxu0 0.0
        %1811 = vmatpush1.msra.mxu0 0.0
        %1812 = vmatprep.subr.mxu0 0.0
        %1813 = vmatpush1.msra.mxu0 0.0
        %1814 = vmatprep.subr.mxu0 0.0
        %1815 = vmatpush1.msra.mxu0 0.0
        %1816 = vmatprep.subr.mxu0 0.0
        %1817 = vmatpush1.msra.mxu0 0.0
        %1818 = vmatprep.subr.mxu0 0.0
        %1819 = vmatpush1.msra.mxu0 0.0
        %1820 = vmatprep.subr.mxu0 0.0
        %1821 = vmatpush1.msra.mxu0 0.0
        %1822 = vmatprep.subr.mxu0 0.0
        %1823 = vmatpush1.msra.mxu0 0.0
        %1824 = vmatprep.subr.mxu0 0.0
        %1825 = vmatpush1.msra.mxu0 0.0
        %1826 = vmatprep.subr.mxu0 0.0
        %1827 = vmatpush1.msra.mxu0 0.0
        %1828 = vmatprep.subr.mxu0 0.0
        %1829 = vmatpush1.msra.mxu0 0.0
        %1830 = vmatprep.subr.mxu0 0.0
        %1831 = vmatpush1.msra.mxu0 0.0
        %1832 = vmatprep.subr.mxu0 0.0
        %1833 = vmatpush1.msra.mxu0 0.0
        %1834 = vmatprep.subr.mxu0 0.0
        %1835 = vmatpush1.msra.mxu0 0.0
        %1836 = vmatprep.subr.mxu0 0.0
        %1837 = vmatpush1.msra.mxu0 0.0
        %1838 = vmatprep.subr.mxu0 0.0
        %1839 = vmatpush1.msra.mxu0 0.0
        %1840 = vmatprep.subr.mxu0 0.0
        %1841 = vmatpush1.msra.mxu0 0.0
        %1842 = vmatprep.subr.mxu0 0.0
        %1843 = vmatpush1.msra.mxu0 0.0
        %1844 = vmatprep.subr.mxu0 0.0
        %1845 = vmatpush1.msra.mxu0 0.0
        %1846 = vmatprep.subr.mxu0 0.0
        %1847 = vmatpush1.msra.mxu0 0.0
        %1848 = vmatprep.subr.mxu0 0.0
        %1849 = vmatpush1.msra.mxu0 0.0
        %1850 = vmatprep.subr.mxu0 0.0
        %1851 = vmatpush1.msra.mxu0 0.0
        %1852 = vmatprep.subr.mxu0 0.0
        %1853 = vmatpush1.msra.mxu0 0.0
        %1854 = vmatprep.subr.mxu0 0.0
        %1855 = vmatpush1.msra.mxu0 0.0
        %1856 = vmatprep.subr.mxu0 0.0
        %1857 = vmatpush1.msra.mxu0 0.0
        %1858 = vmatprep.subr.mxu0 0.0
        %1859 = vmatpush1.msra.mxu0 0.0
        %1860 = vmatprep.subr.mxu0 0.0
        %1861 = vmatpush1.msra.mxu0 0.0
        %1862 = vmatprep.subr.mxu0 0.0
        %1863 = vmatpush1.msra.mxu0 0.0
        %1864 = vmatprep.subr.mxu0 0.0
        %1865 = vmatpush1.msra.mxu0 0.0
        %1866 = vmatprep.subr.mxu0 0.0
        %1867 = vmatpush1.msra.mxu0 0.0
        %1868 = vmatprep.subr.mxu0 0.0
        %1869 = vmatpush1.msra.mxu0 0.0
        %1870 = vmatprep.mubr.f32.mxu0 0.0
        %1871 = vmatmul.mubr.f32.gmra.mrb[0].mxu0 %v1801
        %v1872 = vpop.f32.mrb[0].mxu0
        %v1873 = vadd.f32 0.0, %v1872
        %v1874 = vpop.f32.mrb[0].mxu0
        %1875 = vdwg.mxu0
        %v1877 = vsel %vm873, %v1508, 0
        %1879 = vmatprep.subr.mxu0 0.0
        %1880 = vmatpush1.msra.mxu0 %v830
        %1881 = vmatprep.subr.mxu0 0.0
        %1882 = vmatpush1.msra.mxu0 0.0
        %1883 = vmatprep.subr.mxu0 0.0
        %1884 = vmatpush1.msra.mxu0 0.0
        %1885 = vmatprep.subr.mxu0 0.0
        %1886 = vmatpush1.msra.mxu0 0.0
        %1887 = vmatprep.subr.mxu0 0.0
        %1888 = vmatpush1.msra.mxu0 0.0
        %1889 = vmatprep.subr.mxu0 0.0
        %1890 = vmatpush1.msra.mxu0 0.0
        %1891 = vmatprep.subr.mxu0 0.0
        %1892 = vmatpush1.msra.mxu0 0.0
        %1893 = vmatprep.subr.mxu0 0.0
        %1894 = vmatpush1.msra.mxu0 0.0
        %1895 = vmatprep.subr.mxu0 0.0
        %1896 = vmatpush1.msra.mxu0 0.0
        %1897 = vmatprep.subr.mxu0 0.0
        %1898 = vmatpush1.msra.mxu0 0.0
        %1899 = vmatprep.subr.mxu0 0.0
        %1900 = vmatpush1.msra.mxu0 0.0
        %1901 = vmatprep.subr.mxu0 0.0
        %1902 = vmatpush1.msra.mxu0 0.0
        %1903 = vmatprep.subr.mxu0 0.0
        %1904 = vmatpush1.msra.mxu0 0.0
        %1905 = vmatprep.subr.mxu0 0.0
        %1906 = vmatpush1.msra.mxu0 0.0
        %1907 = vmatprep.subr.mxu0 0.0
        %1908 = vmatpush1.msra.mxu0 0.0
        %1909 = vmatprep.subr.mxu0 0.0
        %1910 = vmatpush1.msra.mxu0 0.0
        %1911 = vmatprep.subr.mxu0 0.0
        %1912 = vmatpush1.msra.mxu0 0.0
        %1913 = vmatprep.subr.mxu0 0.0
        %1914 = vmatpush1.msra.mxu0 0.0
        %1915 = vmatprep.subr.mxu0 0.0
        %1916 = vmatpush1.msra.mxu0 0.0
        %1917 = vmatprep.subr.mxu0 0.0
        %1918 = vmatpush1.msra.mxu0 0.0
        %1919 = vmatprep.subr.mxu0 0.0
        %1920 = vmatpush1.msra.mxu0 0.0
        %1921 = vmatprep.subr.mxu0 0.0
        %1922 = vmatpush1.msra.mxu0 0.0
        %1923 = vmatprep.subr.mxu0 0.0
        %1924 = vmatpush1.msra.mxu0 0.0
        %1925 = vmatprep.subr.mxu0 0.0
        %1926 = vmatpush1.msra.mxu0 0.0
        %1927 = vmatprep.subr.mxu0 0.0
        %1928 = vmatpush1.msra.mxu0 0.0
        %1929 = vmatprep.subr.mxu0 0.0
        %1930 = vmatpush1.msra.mxu0 0.0
        %1931 = vmatprep.subr.mxu0 0.0
        %1932 = vmatpush1.msra.mxu0 0.0
        %1933 = vmatprep.subr.mxu0 0.0
        %1934 = vmatpush1.msra.mxu0 0.0
        %1935 = vmatprep.subr.mxu0 0.0
        %1936 = vmatpush1.msra.mxu0 0.0
        %1937 = vmatprep.subr.mxu0 0.0
        %1938 = vmatpush1.msra.mxu0 0.0
        %1939 = vmatprep.subr.mxu0 0.0
        %1940 = vmatpush1.msra.mxu0 0.0
        %1941 = vmatprep.subr.mxu0 0.0
        %1942 = vmatpush1.msra.mxu0 0.0
        %1943 = vmatprep.mubr.f32.mxu0 0.0
        %1944 = vmatmul.mubr.f32.gmra.mrb[0].mxu0 %v1877
        %v1945 = vpop.f32.mrb[0].mxu0
        %v1946 = vadd.f32 %v1645, %v1945
        %v1947 = vpop.f32.mrb[0].mxu0
        %1948 = vdwg.mxu0
        %v1950 = vsel %vm873, %v1510, 0
        %1952 = vmatprep.subr.mxu0 0.0
        %1953 = vmatpush1.msra.mxu0 %v849
        %1954 = vmatprep.subr.mxu0 0.0
        %1955 = vmatpush1.msra.mxu0 0.0
        %1956 = vmatprep.subr.mxu0 0.0
        %1957 = vmatpush1.msra.mxu0 0.0
        %1958 = vmatprep.subr.mxu0 0.0
        %1959 = vmatpush1.msra.mxu0 0.0
        %1960 = vmatprep.subr.mxu0 0.0
        %1961 = vmatpush1.msra.mxu0 0.0
        %1962 = vmatprep.subr.mxu0 0.0
        %1963 = vmatpush1.msra.mxu0 0.0
        %1964 = vmatprep.subr.mxu0 0.0
        %1965 = vmatpush1.msra.mxu0 0.0
        %1966 = vmatprep.subr.mxu0 0.0
        %1967 = vmatpush1.msra.mxu0 0.0
        %1968 = vmatprep.subr.mxu0 0.0
        %1969 = vmatpush1.msra.mxu0 0.0
        %1970 = vmatprep.subr.mxu0 0.0
        %1971 = vmatpush1.msra.mxu0 0.0
        %1972 = vmatprep.subr.mxu0 0.0
        %1973 = vmatpush1.msra.mxu0 0.0
        %1974 = vmatprep.subr.mxu0 0.0
        %1975 = vmatpush1.msra.mxu0 0.0
        %1976 = vmatprep.subr.mxu0 0.0
        %1977 = vmatpush1.msra.mxu0 0.0
        %1978 = vmatprep.subr.mxu0 0.0
        %1979 = vmatpush1.msra.mxu0 0.0
        %1980 = vmatprep.subr.mxu0 0.0
        %1981 = vmatpush1.msra.mxu0 0.0
        %1982 = vmatprep.subr.mxu0 0.0
        %1983 = vmatpush1.msra.mxu0 0.0
        %1984 = vmatprep.subr.mxu0 0.0
        %1985 = vmatpush1.msra.mxu0 0.0
        %1986 = vmatprep.subr.mxu0 0.0
        %1987 = vmatpush1.msra.mxu0 0.0
        %1988 = vmatprep.subr.mxu0 0.0
        %1989 = vmatpush1.msra.mxu0 0.0
        %1990 = vmatprep.subr.mxu0 0.0
        %1991 = vmatpush1.msra.mxu0 0.0
        %1992 = vmatprep.subr.mxu0 0.0
        %1993 = vmatpush1.msra.mxu0 0.0
        %1994 = vmatprep.subr.mxu0 0.0
        %1995 = vmatpush1.msra.mxu0 0.0
        %1996 = vmatprep.subr.mxu0 0.0
        %1997 = vmatpush1.msra.mxu0 0.0
        %1998 = vmatprep.subr.mxu0 0.0
        %1999 = vmatpush1.msra.mxu0 0.0
        %2000 = vmatprep.subr.mxu0 0.0
        %2001 = vmatpush1.msra.mxu0 0.0
        %2002 = vmatprep.subr.mxu0 0.0
        %2003 = vmatpush1.msra.mxu0 0.0
        %2004 = vmatprep.subr.mxu0 0.0
        %2005 = vmatpush1.msra.mxu0 0.0
        %2006 = vmatprep.subr.mxu0 0.0
        %2007 = vmatpush1.msra.mxu0 0.0
        %2008 = vmatprep.subr.mxu0 0.0
        %2009 = vmatpush1.msra.mxu0 0.0
        %2010 = vmatprep.subr.mxu0 0.0
        %2011 = vmatpush1.msra.mxu0 0.0
        %2012 = vmatprep.subr.mxu0 0.0
        %2013 = vmatpush1.msra.mxu0 0.0
        %2014 = vmatprep.subr.mxu0 0.0
        %2015 = vmatpush1.msra.mxu0 0.0
        %2016 = vmatprep.mubr.f32.mxu0 0.0
        %2017 = vmatmul.mubr.f32.gmra.mrb[0].mxu0 %v1950
        %v2018 = vpop.f32.mrb[0].mxu0
        %v2019 = vadd.f32 %v1721, %v2018
        %v2020 = vpop.f32.mrb[0].mxu0
        %2021 = vdwg.mxu0
        %v2023 = vsel %vm873, %v1512, 0
        %2025 = vmatprep.subr.mxu0 0.0
        %2026 = vmatpush1.msra.mxu0 %v852
        %2027 = vmatprep.subr.mxu0 0.0
        %2028 = vmatpush1.msra.mxu0 0.0
        %2029 = vmatprep.subr.mxu0 0.0
        %2030 = vmatpush1.msra.mxu0 0.0
        %2031 = vmatprep.subr.mxu0 0.0
        %2032 = vmatpush1.msra.mxu0 0.0
        %2033 = vmatprep.subr.mxu0 0.0
        %2034 = vmatpush1.msra.mxu0 0.0
        %2035 = vmatprep.subr.mxu0 0.0
        %2036 = vmatpush1.msra.mxu0 0.0
        %2037 = vmatprep.subr.mxu0 0.0
        %2038 = vmatpush1.msra.mxu0 0.0
        %2039 = vmatprep.subr.mxu0 0.0
        %2040 = vmatpush1.msra.mxu0 0.0
        %2041 = vmatprep.subr.mxu0 0.0
        %2042 = vmatpush1.msra.mxu0 0.0
        %2043 = vmatprep.subr.mxu0 0.0
        %2044 = vmatpush1.msra.mxu0 0.0
        %2045 = vmatprep.subr.mxu0 0.0
        %2046 = vmatpush1.msra.mxu0 0.0
        %2047 = vmatprep.subr.mxu0 0.0
        %2048 = vmatpush1.msra.mxu0 0.0
        %2049 = vmatprep.subr.mxu0 0.0
        %2050 = vmatpush1.msra.mxu0 0.0
        %2051 = vmatprep.subr.mxu0 0.0
        %2052 = vmatpush1.msra.mxu0 0.0
        %2053 = vmatprep.subr.mxu0 0.0
        %2054 = vmatpush1.msra.mxu0 0.0
        %2055 = vmatprep.subr.mxu0 0.0
        %2056 = vmatpush1.msra.mxu0 0.0
        %2057 = vmatprep.subr.mxu0 0.0
        %2058 = vmatpush1.msra.mxu0 0.0
        %2059 = vmatprep.subr.mxu0 0.0
        %2060 = vmatpush1.msra.mxu0 0.0
        %2061 = vmatprep.subr.mxu0 0.0
        %2062 = vmatpush1.msra.mxu0 0.0
        %2063 = vmatprep.subr.mxu0 0.0
        %2064 = vmatpush1.msra.mxu0 0.0
        %2065 = vmatprep.subr.mxu0 0.0
        %2066 = vmatpush1.msra.mxu0 0.0
        %2067 = vmatprep.subr.mxu0 0.0
        %2068 = vmatpush1.msra.mxu0 0.0
        %2069 = vmatprep.subr.mxu0 0.0
        %2070 = vmatpush1.msra.mxu0 0.0
        %2071 = vmatprep.subr.mxu0 0.0
        %2072 = vmatpush1.msra.mxu0 0.0
        %2073 = vmatprep.subr.mxu0 0.0
        %2074 = vmatpush1.msra.mxu0 0.0
        %2075 = vmatprep.subr.mxu0 0.0
        %2076 = vmatpush1.msra.mxu0 0.0
        %2077 = vmatprep.subr.mxu0 0.0
        %2078 = vmatpush1.msra.mxu0 0.0
        %2079 = vmatprep.subr.mxu0 0.0
        %2080 = vmatpush1.msra.mxu0 0.0
        %2081 = vmatprep.subr.mxu0 0.0
        %2082 = vmatpush1.msra.mxu0 0.0
        %2083 = vmatprep.subr.mxu0 0.0
        %2084 = vmatpush1.msra.mxu0 0.0
        %2085 = vmatprep.subr.mxu0 0.0
        %2086 = vmatpush1.msra.mxu0 0.0
        %2087 = vmatprep.subr.mxu0 0.0
        %2088 = vmatpush1.msra.mxu0 0.0
        %2089 = vmatprep.mubr.f32.mxu0 0.0
        %2090 = vmatmul.mubr.f32.gmra.mrb[0].mxu0 %v2023
        %v2091 = vpop.f32.mrb[0].mxu0
        %v2092 = vadd.f32 %v1797, %v2091
        %v2093 = vpop.f32.mrb[0].mxu0
        %2094 = vdwg.mxu0
        %v2096 = vsel %vm873, %v1514, 0
        %2098 = vmatprep.subr.mxu0 0.0
        %2099 = vmatpush1.msra.mxu0 %v855
        %2100 = vmatprep.subr.mxu0 0.0
        %2101 = vmatpush1.msra.mxu0 0.0
        %2102 = vmatprep.subr.mxu0 0.0
        %2103 = vmatpush1.msra.mxu0 0.0
        %2104 = vmatprep.subr.mxu0 0.0
        %2105 = vmatpush1.msra.mxu0 0.0
        %2106 = vmatprep.subr.mxu0 0.0
        %2107 = vmatpush1.msra.mxu0 0.0
        %2108 = vmatprep.subr.mxu0 0.0
        %2109 = vmatpush1.msra.mxu0 0.0
        %2110 = vmatprep.subr.mxu0 0.0
        %2111 = vmatpush1.msra.mxu0 0.0
        %2112 = vmatprep.subr.mxu0 0.0
        %2113 = vmatpush1.msra.mxu0 0.0
        %2114 = vmatprep.subr.mxu0 0.0
        %2115 = vmatpush1.msra.mxu0 0.0
        %2116 = vmatprep.subr.mxu0 0.0
        %2117 = vmatpush1.msra.mxu0 0.0
        %2118 = vmatprep.subr.mxu0 0.0
        %2119 = vmatpush1.msra.mxu0 0.0
        %2120 = vmatprep.subr.mxu0 0.0
        %2121 = vmatpush1.msra.mxu0 0.0
        %2122 = vmatprep.subr.mxu0 0.0
        %2123 = vmatpush1.msra.mxu0 0.0
        %2124 = vmatprep.subr.mxu0 0.0
        %2125 = vmatpush1.msra.mxu0 0.0
        %2126 = vmatprep.subr.mxu0 0.0
        %2127 = vmatpush1.msra.mxu0 0.0
        %2128 = vmatprep.subr.mxu0 0.0
        %2129 = vmatpush1.msra.mxu0 0.0
        %2130 = vmatprep.subr.mxu0 0.0
        %2131 = vmatpush1.msra.mxu0 0.0
        %2132 = vmatprep.subr.mxu0 0.0
        %2133 = vmatpush1.msra.mxu0 0.0
        %2134 = vmatprep.subr.mxu0 0.0
        %2135 = vmatpush1.msra.mxu0 0.0
        %2136 = vmatprep.subr.mxu0 0.0
        %2137 = vmatpush1.msra.mxu0 0.0
        %2138 = vmatprep.subr.mxu0 0.0
        %2139 = vmatpush1.msra.mxu0 0.0
        %2140 = vmatprep.subr.mxu0 0.0
        %2141 = vmatpush1.msra.mxu0 0.0
        %2142 = vmatprep.subr.mxu0 0.0
        %2143 = vmatpush1.msra.mxu0 0.0
        %2144 = vmatprep.subr.mxu0 0.0
        %2145 = vmatpush1.msra.mxu0 0.0
        %2146 = vmatprep.subr.mxu0 0.0
        %2147 = vmatpush1.msra.mxu0 0.0
        %2148 = vmatprep.subr.mxu0 0.0
        %2149 = vmatpush1.msra.mxu0 0.0
        %2150 = vmatprep.subr.mxu0 0.0
        %2151 = vmatpush1.msra.mxu0 0.0
        %2152 = vmatprep.subr.mxu0 0.0
        %2153 = vmatpush1.msra.mxu0 0.0
        %2154 = vmatprep.subr.mxu0 0.0
        %2155 = vmatpush1.msra.mxu0 0.0
        %2156 = vmatprep.subr.mxu0 0.0
        %2157 = vmatpush1.msra.mxu0 0.0
        %2158 = vmatprep.subr.mxu0 0.0
        %2159 = vmatpush1.msra.mxu0 0.0
        %2160 = vmatprep.subr.mxu0 0.0
        %2161 = vmatpush1.msra.mxu0 0.0
        %2162 = vmatprep.mubr.f32.mxu0 0.0
        %2163 = vmatmul.mubr.f32.gmra.mrb[0].mxu0 %v2096
        %v2164 = vpop.f32.mrb[0].mxu0
        %v2165 = vadd.f32 %v1873, %v2164
        %v2166 = vpop.f32.mrb[0].mxu0
        %2167 = vdwg.mxu0
        %v2168 = vmul.f32 %v1946, %v1567
        %v2169 = vmul.f32 %v2019, %v1568
        %v2170 = vmul.f32 %v2092, %v1569
        %v2171 = vmul.f32 %v2165, %v1570
        %2172 = vst.msk [vmem:[#allocation2] sm:$0xff] %vm873, %v2168
        %2174 = vrot.lane.b32.xlu0 %v2169, 8
        %v2175 = vpop.permute.xlu0 %2174
        %vm2177 = vcmask 130112
        %2178 = vst.msk [vmem:[#allocation2] sm:$0xff] %vm2177, %v2175
        %2180 = vrot.lane.b32.xlu0 %v2170, 16
        %v2181 = vpop.permute.xlu0 %2180
        %vm2183 = vcmask 195712
        %2184 = vst.msk [vmem:[#allocation2] sm:$0xff] %vm2183, %v2181
        %2186 = vrot.lane.b32.xlu0 %v2171, 24
        %v2187 = vpop.permute.xlu0 %2186
        %vm2189 = vcmask 261312
        %2190 = vst.msk [vmem:[#allocation2] sm:$0xff] %vm2189, %v2187
        %v2191 = vld [vmem:[#allocation2] sm:$0xff]
        %v2192 = vld [vmem:[%s11] sm:$0xff]
        %v2193 = vld [vmem:[%s11 + $0x8] sm:$0xff]
        %v2194 = vld [vmem:[%s11 + $0x10] sm:$0xff]
        %v2195 = vld [vmem:[%s11 + $0x18] sm:$0xff]
        %v2196 = vld [vmem:[%s12] sm:$0x1]
        %v2198 = vlaneseq
        %v2199 = vshrl.u32 %v2198, 7
        %v2200 = vsub.s32 0, %v2199
        %v2201 = vrot.slane %v2196, %v2200
        %vm2203 = vcmask 261120
        %v2205 = vsel %vm2203, %v2191, 0
        %2207 = vmatprep.subr.mxu0 0.0
        %2208 = vmatpush1.msra.mxu0 %v2192
        %2209 = vmatprep.subr.mxu0 0.0
        %2210 = vmatpush1.msra.mxu0 %v2193
        %2211 = vmatprep.subr.mxu0 0.0
        %2212 = vmatpush1.msra.mxu0 %v2194
        %2213 = vmatprep.subr.mxu0 0.0
        %2214 = vmatpush1.msra.mxu0 %v2195
        %2215 = vmatprep.subr.mxu0 0.0
        %2216 = vmatpush1.msra.mxu0 0.0
        %2217 = vmatprep.subr.mxu0 0.0
        %2218 = vmatpush1.msra.mxu0 0.0
        %2219 = vmatprep.subr.mxu0 0.0
        %2220 = vmatpush1.msra.mxu0 0.0
        %2221 = vmatprep.subr.mxu0 0.0
        %2222 = vmatpush1.msra.mxu0 0.0
        %2223 = vmatprep.subr.mxu0 0.0
        %2224 = vmatpush1.msra.mxu0 0.0
        %2225 = vmatprep.subr.mxu0 0.0
        %2226 = vmatpush1.msra.mxu0 0.0
        %2227 = vmatprep.subr.mxu0 0.0
        %2228 = vmatpush1.msra.mxu0 0.0
        %2229 = vmatprep.subr.mxu0 0.0
        %2230 = vmatpush1.msra.mxu0 0.0
        %2231 = vmatprep.subr.mxu0 0.0
        %2232 = vmatpush1.msra.mxu0 0.0
        %2233 = vmatprep.subr.mxu0 0.0
        %2234 = vmatpush1.msra.mxu0 0.0
        %2235 = vmatprep.subr.mxu0 0.0
        %2236 = vmatpush1.msra.mxu0 0.0
        %2237 = vmatprep.subr.mxu0 0.0
        %2238 = vmatpush1.msra.mxu0 0.0
        %2239 = vmatprep.subr.mxu0 0.0
        %2240 = vmatpush1.msra.mxu0 0.0
        %2241 = vmatprep.subr.mxu0 0.0
        %2242 = vmatpush1.msra.mxu0 0.0
        %2243 = vmatprep.subr.mxu0 0.0
        %2244 = vmatpush1.msra.mxu0 0.0
        %2245 = vmatprep.subr.mxu0 0.0
        %2246 = vmatpush1.msra.mxu0 0.0
        %2247 = vmatprep.subr.mxu0 0.0
        %2248 = vmatpush1.msra.mxu0 0.0
        %2249 = vmatprep.subr.mxu0 0.0
        %2250 = vmatpush1.msra.mxu0 0.0
        %2251 = vmatprep.subr.mxu0 0.0
        %2252 = vmatpush1.msra.mxu0 0.0
        %2253 = vmatprep.subr.mxu0 0.0
        %2254 = vmatpush1.msra.mxu0 0.0
        %2255 = vmatprep.subr.mxu0 0.0
        %2256 = vmatpush1.msra.mxu0 0.0
        %2257 = vmatprep.subr.mxu0 0.0
        %2258 = vmatpush1.msra.mxu0 0.0
        %2259 = vmatprep.subr.mxu0 0.0
        %2260 = vmatpush1.msra.mxu0 0.0
        %2261 = vmatprep.subr.mxu0 0.0
        %2262 = vmatpush1.msra.mxu0 0.0
        %2263 = vmatprep.subr.mxu0 0.0
        %2264 = vmatpush1.msra.mxu0 0.0
        %2265 = vmatprep.subr.mxu0 0.0
        %2266 = vmatpush1.msra.mxu0 0.0
        %2267 = vmatprep.subr.mxu0 0.0
        %2268 = vmatpush1.msra.mxu0 0.0
        %2269 = vmatprep.subr.mxu0 0.0
        %2270 = vmatpush1.msra.mxu0 0.0
        %2271 = vmatprep.mubr.f32.mxu0 0.0
        %2272 = vmatmul.mubr.f32.gmra.mrb[0].mxu0 %v2205
        %v2273 = vpop.f32.mrb[0].mxu0
        %v2274 = vadd.f32 %v2201, %v2273
        %v2275 = vpop.f32.mrb[0].mxu0
        %2276 = vdwg.mxu0
        %v2277 = vld [vmem:[%s542] sm:$0xff]
        %v2278 = vadd.f32 %v2277, %v2274
        %v2279 = vld [vmem:[%s15] sm:$0x1]
        %2280 = vadd.xlane.f32.xlu0 %v2278
        %v2281 = vpop.xlane.xlu0 %2280
        %v2282 = vmul.f32 %v2281, 0.03125
        %v2283 = vsub.f32 %v2278, %v2282
        %v2285 = vlaneseq
        %v2286 = vshrl.u32 %v2285, 7
        %v2287 = vsub.s32 0, %v2286
        %v2288 = vrot.slane %v2279, %v2287
        %v2290 = vmul.f32 %v2283, %v2288
        %v2291 = vmul.f32 %v2290, %v2290
        %2292 = vadd.xlane.f32.xlu0 %v2291
        %v2293 = vpop.xlane.xlu0 %2292
        %v2294 = vmul.f32 %v2293, 0.03125
        %v2295 = vadd.f32 %v2294, 1e-05
        %v2296 = vrsqrt.pop %v2295
        %v2297 = vmul.f32 %v2290, %v2296
        %v2298 = vld [vmem:[%s13] sm:$0x1]
        %v2300 = vlaneseq
        %v2301 = vshrl.u32 %v2300, 7
        %v2302 = vsub.s32 0, %v2301
        %v2303 = vrot.slane %v2298, %v2302
        %v2305 = vmul.f32 %v2297, %v2303
        %v2306 = vld [vmem:[%s14] sm:$0x1]
        %v2308 = vlaneseq
        %v2309 = vshrl.u32 %v2308, 7
        %v2310 = vsub.s32 0, %v2309
        %v2311 = vrot.slane %v2306, %v2310
        %v2313 = vadd.f32 %v2305, %v2311
        %2314 = vst [vmem:[%s538] sm:$0xff] %v2313
        %s2315 = sand.u32 %s389, 1
        %s2316 = scalar_lea.sflag [#allocation4], %s2315
        %s2317 = sand.u32 %s389, 1
        %s2318 = smul.addr %s2317, 8
        %s2319 = scalar_lea.vmem [#allocation3], %s2318
        // Predicated region
        $region85: #{tpu_custom_call.1} parent=83 // pred_check
          %p2320 = pneg %p399
        $region86: #{tpu_custom_call.1} parent=83 // pred_check_branch
          %2322 = sbr.rel (%p2320) target = $region88
        $region87: #{tpu_custom_call.1} parent=83 // pred_region
          %s2324 = ssub.s32 128, 128
          %2325 = vsyncadd %s2316, %s2324
          %s2326 = smul.addr %s30, 128
          %s2327 = scalar_lea.hbm %s16, %s2326
          %s2329 = sshll.u32 %s2319, 4
          %s2330 = int_to_ptr.vmem [resolvable:$true] %s2329
          %2332 = dma.vmem_to_hbm [thread:$0]  %s2330, 128, %s2327, %s2316
        $region88: #{tpu_custom_call.1} parent=83 // pred_fallthru
          _
      $region84: #{tpu_custom_call.1} parent=5 // pred_fallthru
        _
      %p2333 = scmp.le.s32.totalorder 2, %s25
      // Predicated region
      $region89: #{tpu_custom_call.1} parent=5 // pred_check
        %p2334 = pneg %p2333
      $region90: #{tpu_custom_call.1} parent=5 // pred_check_branch
        %2336 = sbr.rel (%p2334) target = $region92
      $region91: #{tpu_custom_call.1} parent=5 // pred_region
        %s2337 = ssub.s32 %s25, 2
        // Predicated region
        $region93: #{tpu_custom_call.1} parent=91 // pred_check
          %p2338 = pneg %p405
        $region94: #{tpu_custom_call.1} parent=91 // pred_check_branch
          %2340 = sbr.rel (%p2338) target = $region96
        $region95: #{tpu_custom_call.1} parent=91 // pred_region
          %s2341 = sand.u32 %s390, 1
          %s2342 = scalar_lea.sflag [#allocation4], %s2341
          %s2343 = sand.u32 %s390, 1
          %s2344 = smul.addr %s2343, 8
          %s2345 = scalar_lea.vmem [#allocation3], %s2344
          %2346 = dma.done %s2342, 128
        $region96: #{tpu_custom_call.1} parent=91 // pred_fallthru
          _
      $region92: #{tpu_custom_call.1} parent=5 // pred_fallthru
        _
    $region6: #{tpu_custom_call.1} parent=1 // loop_footer
      %s29 = sadd.s32 1, %s25
    $region7: #{tpu_custom_call.1} parent=1 // loop_footer_branch
      %24 = sbr.rel target = $region3
    $region8: #{tpu_custom_call.1} parent=1 // loop_exit
      _
    %2347 = vsyncpa [#allocation4], 1
    %s2348 = scalar_lea.sflag [#allocation4], 1
    %2349 = vsyncpa %s2348, 1

</llo_original>
